<compile_context>
chip_gen: v7x
topology: tpu7x:2x2x1
jax: 0.10.0
libtpu: 0.0.40
codegen_flags: <defaults>
</compile_context>

<pallas_src>
import math

import jax
import jax.numpy as jnp
from jax.experimental import pallas as pl
from jax.experimental.pallas import tpu as pltpu

_EPS = 1e-5                      # PyTorch BatchNorm2d default eps
_VMEM_LIMIT = 48 * 1024 * 1024   # <= v7x's 64 MiB physical VMEM; working sets ~8 MiB
_TM_CAP = 512                    # rows per grid step; multiple of 16 for bf16 sublanes


# ----------------------------------------------------------------- helpers ---
def _round_up(x, m):
    return (x + m - 1) // m * m


# ----------------------------------------------------------------- kernels ---
def _mm_stats_kernel(p_ref, w_ref, y_ref, stats_ref):
    """One M-tile of Y = P @ W (bf16 operands, f32 MXU accumulate) plus per-tile
    per-column sum / sum-of-squares (partial BatchNorm batch statistics).
    The weight block index is constant along the M grid axis, so W stays resident
    in VMEM - no K loop, no scratch accumulator."""
    acc = jnp.dot(p_ref[...], w_ref[...], preferred_element_type=jnp.float32)
    y_ref[...] = acc.astype(y_ref.dtype)
    s = jnp.sum(acc, axis=0, keepdims=True)        # (1, N)
    sq = jnp.sum(acc * acc, axis=0, keepdims=True)  # (1, N)
    stats_ref[...] = jnp.concatenate([s, sq], axis=0)


def _mm_tanh_kernel(p_ref, w_ref, o_ref):
    """One M-tile of tanh(P @ W) for the final layer (f32 epilogue, unpadded Cout)."""
    acc = jnp.dot(p_ref[...], w_ref[...], preferred_element_type=jnp.float32)
    o_ref[...] = jnp.tanh(acc).astype(o_ref.dtype)


# ---------------------------------------------------------- pallas wrappers ---
def _gemm_stats(P, Wm):
    """P: (npar, M, K) bf16, Wm: (npar, K, N) bf16 (resident per parity).
    Returns (Y (npar, Mp, N) bf16, stats (npar, nm, 2, N) f32, TM, nm, M)."""
    npar, M, K = P.shape
    N = Wm.shape[-1]
    TM = min(_TM_CAP, _round_up(M, 16))
    Mp = _round_up(M, TM)
    nm = Mp // TM
    Pp = jnp.pad(P, ((0, 0), (0, Mp - M), (0, 0)))

    y, stats = pl.pallas_call(
        _mm_stats_kernel,
        out_shape=(jax.ShapeDtypeStruct((npar, Mp, N), jnp.bfloat16),
                   jax.ShapeDtypeStruct((npar, nm, 2, N), jnp.float32)),
        grid_spec=pltpu.PrefetchScalarGridSpec(
            num_scalar_prefetch=0,
            grid=(npar, nm),
            in_specs=[pl.BlockSpec((None, TM, K), lambda p, i: (p, i, 0)),
                      pl.BlockSpec((None, K, N), lambda p, i: (p, 0, 0))],
            out_specs=[pl.BlockSpec((None, TM, N), lambda p, i: (p, i, 0)),
                       pl.BlockSpec((None, None, 2, N), lambda p, i: (p, i, 0, 0))]),
        compiler_params=pltpu.CompilerParams(
            dimension_semantics=("parallel", "parallel"),
            vmem_limit_bytes=_VMEM_LIMIT),
        cost_estimate=pl.CostEstimate(
            flops=2 * npar * Mp * K * N,
            transcendentals=0,
            bytes_accessed=2 * npar * (Mp * K + K * N + Mp * N) + 4 * npar * nm * 2 * N),
    )(Pp, Wm)
    return y, stats, TM, nm, M


def _gemm_tanh(P, Wm):
    """P: (npar, M, K) bf16, Wm: (npar, K, N) bf16.  Returns tanh(P @ W) f32 (npar, Mp, N)."""
    npar, M, K = P.shape
    N = Wm.shape[-1]
    TM = min(_TM_CAP, _round_up(M, 16))
    Mp = _round_up(M, TM)
    nm = Mp // TM
    Pp = jnp.pad(P, ((0, 0), (0, Mp - M), (0, 0)))

    return pl.pallas_call(
        _mm_tanh_kernel,
        out_shape=jax.ShapeDtypeStruct((npar, Mp, N), jnp.float32),
        grid_spec=pltpu.PrefetchScalarGridSpec(
            num_scalar_prefetch=0,
            grid=(npar, nm),
            in_specs=[pl.BlockSpec((None, TM, K), lambda p, i: (p, i, 0)),
                      pl.BlockSpec((None, K, N), lambda p, i: (p, 0, 0))],
            out_specs=pl.BlockSpec((None, TM, N), lambda p, i: (p, i, 0))),
        compiler_params=pltpu.CompilerParams(
            dimension_semantics=("parallel", "parallel"),
            vmem_limit_bytes=_VMEM_LIMIT),
        cost_estimate=pl.CostEstimate(
            flops=2 * npar * Mp * K * N,
            transcendentals=npar * Mp * N,
            bytes_accessed=2 * npar * (Mp * K + K * N) + 4 * npar * Mp * N),
    )(Pp, Wm)


# --------------------------------------------------------- BatchNorm (stats) ---
def _bn_scale_shift(stats, gamma, beta, TM, nm, M):
    """Combine per-(parity, M-tile) (sum, sumsq) partials into global batch-stat
    scale/shift.  Chan-style group combine avoids E[y^2]-E[y]^2 cancellation.
    Zero-padded rows of P contribute zeros and are excluded via per-tile counts."""
    npar, _, _, N = stats.shape
    sums = stats[:, :, 0, :].reshape(npar * nm, N)
    sqs = stats[:, :, 1, :].reshape(npar * nm, N)
    cnts = jnp.asarray([min(TM, M - i * TM) for i in range(nm)], jnp.float32)
    cnts = jnp.tile(cnts, npar)[:, None]                       # (npar*nm, 1)
    r_total = float(npar * M)

    mean = jnp.sum(sums, axis=0) / r_total                     # (N,)
    mean_t = sums / cnts                                       # per-tile mean
    m2_t = sqs - sums * mean_t                                 # per-tile sum (y-mu_t)^2
    m2 = jnp.sum(m2_t + cnts * jnp.square(mean_t - mean[None, :]), axis=0)
    var = m2 / r_total                                         # biased (PyTorch BN fwd)

    inv = jax.lax.rsqrt(var + _EPS)
    scale = gamma.reshape(-1).astype(jnp.float32) * inv
    shift = beta.reshape(-1).astype(jnp.float32) - mean * scale
    return scale, shift                                        # (N,), (N,)


# --------------------------------------------------------------- conv glue ---
def _deconv_patches(x_nhwc, K, stride, pad):
    """Generic im2col for ConvTranspose2d as a zero-dilated stride-1 conv.
    Only used for the first (stride=1, 1x1-spatial input) layer (tiny)."""
    B, H, W, C = x_nhwc.shape
    Hu = (H - 1) * stride + 1
    Wu = (W - 1) * stride + 1
    x_up = jnp.zeros((B, Hu, Wu, C), x_nhwc.dtype)
    x_up = x_up.at[:, ::stride, ::stride, :].set(x_nhwc)
    p = K - 1 - pad
    x_pad = jnp.pad(x_up, ((0, 0), (p, p), (p, p), (0, 0)))
    OH = Hu + 2 * p - (K - 1)
    OW = Wu + 2 * p - (K - 1)
    cols = [x_pad[:, kh:kh + OH, kw:kw + OW, :] for kh in range(K) for kw in range(K)]
    patches = jnp.concatenate(cols, axis=-1)
    return patches.reshape(B * OH * OW, K * K * C), (B, OH, OW)


def _deconv_weight_matrix(w_t):
    """(Cin, Cout, K, K) -> (K*K*Cin, Cout), flipped, matching _deconv_patches order."""
    Cin, Cout, K, _ = w_t.shape
    w_flip = w_t[:, :, ::-1, ::-1]
    return jnp.transpose(w_flip, (2, 3, 0, 1)).reshape(K * K * Cin, Cout)


def _subpixel_weights(w_t):
    """Per-output-parity 2x2 weight matrices for ConvTranspose2d(4, stride=2, pad=1).
    For parity (ph, pw) and tap (dh, dw) the kernel index is kh = 3 - 2*dh - ph.
    Returns (4, 4*Cin, Cout), parity order (0,0),(0,1),(1,0),(1,1)."""
    Cin, Cout = w_t.shape[0], w_t.shape[1]
    mats = []
    for ph in (0, 1):
        for pw in (0, 1):
            kh = [3 - 2 * dh - ph for dh in (0, 1)]
            kw = [3 - 2 * dw - pw for dw in (0, 1)]
            w_sub = w_t[:, :, kh, :][:, :, :, kw]              # (Cin, Cout, dh, dw)
            mats.append(jnp.transpose(w_sub, (2, 3, 0, 1)).reshape(4 * Cin, Cout))
    return jnp.stack(mats, axis=0)


def _subpixel_patches_all(x):
    """All four output-parity im2col matrices of the sub-pixel decomposition,
    built from ONE symmetrically padded copy of x.  Returns (4, B*H*W, 4*Cin) bf16."""
    x = x.astype(jnp.bfloat16)
    B, H, W, C = x.shape
    xp = jnp.pad(x, ((0, 0), (1, 1), (1, 1), (0, 0)))
    ps = []
    for ph in (0, 1):
        for pw in (0, 1):
            cols = [xp[:, dh + ph:dh + ph + H, dw + pw:dw + pw + W, :]
                    for dh in (0, 1) for dw in (0, 1)]
            ps.append(jnp.concatenate(cols, axis=-1).reshape(B * H * W, 4 * C))
    return jnp.stack(ps, axis=0)


def _interleave(parts, B, H, W, C):
    """parts ordered [(ph=0,pw=0),(0,1),(1,0),(1,1)] -> (B, 2H, 2W, C)."""
    y = jnp.stack(parts, axis=0).reshape(2, 2, B, H, W, C)
    y = jnp.transpose(y, (2, 3, 0, 4, 1, 5))   # (B, H, ph, W, pw, C)
    return y.reshape(B, 2 * H, 2 * W, C)


# --------------------------------------------------------------- parameters ---
def init_generator_params(key, img_size, latent_dim, base_ch=64, img_ch=3):
    assert img_size & (img_size - 1) == 0 and img_size >= 32, \
        "img_size must be power of 2 >= 32"
    n_ups = int(math.log2(img_size)) - 3
    ch = base_ch * 2 ** n_ups
    layers = []

    k, key = jax.random.split(key)
    w = 0.1 * jax.random.normal(k, (latent_dim, ch, 4, 4), jnp.float32)
    layers.append(dict(kind="deconv_s1", w_raw=w, stride=1, pad=0,
                       wm=_deconv_weight_matrix(w)[None].astype(jnp.bfloat16),
                       gamma=jnp.ones((ch,), jnp.float32),
                       beta=jnp.zeros((ch,), jnp.float32)))

    for _ in range(n_ups):
        k, key = jax.random.split(key)
        w = 0.1 * jax.random.normal(k, (ch, ch // 2, 4, 4), jnp.float32)
        layers.append(dict(kind="deconv_s2_bn", w_raw=w, stride=2, pad=1,
                           wm=_subpixel_weights(w).astype(jnp.bfloat16),
                           gamma=jnp.ones((ch // 2,), jnp.float32),
                           beta=jnp.zeros((ch // 2,), jnp.float32)))
        ch //= 2

    k, key = jax.random.split(key)
    w = 0.1 * jax.random.normal(k, (ch, img_ch, 4, 4), jnp.float32)
    layers.append(dict(kind="deconv_s2_tanh", w_raw=w, stride=2, pad=1,
                       wm=_subpixel_weights(w).astype(jnp.bfloat16),
                       gamma=None, beta=None))
    return layers


# ------------------------------------------------------------------- forward ---
def generator_forward(params, z_nchw):
    """z: (B, latent_dim, 1, 1) NCHW -> img: (B, img_ch, S, S) NCHW, like the PyTorch net."""
    x = jnp.transpose(z_nchw, (0, 2, 3, 1)).astype(jnp.bfloat16)     # NHWC
    scale = shift = None
    for layer in params:
        if scale is not None:
            # Previous layer's BatchNorm + ReLU, folded into this layer's input
            # (before this layer's spatial zero padding; XLA fuses it with the im2col).
            x = jnp.maximum(x.astype(jnp.float32) * scale + shift, 0.0)

        if layer["kind"] == "deconv_s1":
            P, (B, OH, OW) = _deconv_patches(x, 4, 1, 0)
            y, stats, TM, nm, M = _gemm_stats(P[None].astype(jnp.bfloat16), layer["wm"])
            scale, shift = _bn_scale_shift(stats, layer["gamma"], layer["beta"], TM, nm, M)
            Cout = layer["wm"].shape[-1]
            x = y[0, :M].reshape(B, OH, OW, Cout)

        elif layer["kind"] == "deconv_s2_bn":
            B, H, W, _ = x.shape
            P4 = _subpixel_patches_all(x)
            y, stats, TM, nm, M = _gemm_stats(P4, layer["wm"])
            scale, shift = _bn_scale_shift(stats, layer["gamma"], layer["beta"], TM, nm, M)
            Cout = layer["wm"].shape[-1]
            parts = [y[p, :M].reshape(B, H, W, Cout) for p in range(4)]
            x = _interleave(parts, B, H, W, Cout)

        else:  # "deconv_s2_tanh"
            B, H, W, _ = x.shape
            P4 = _subpixel_patches_all(x)
            y = _gemm_tanh(P4, layer["wm"])
            Cout = layer["wm"].shape[-1]
            M = B * H * W
            parts = [y[p, :M].reshape(B, H, W, Cout) for p in range(4)]
            x = _interleave(parts, B, H, W, Cout)
            scale = shift = None

    return jnp.transpose(x, (0, 3, 1, 2)).astype(jnp.float32)        # NCHW


# ------------------------------------------------------------------ reference ---
def _ref_forward(params, z_nchw):
    """Pure-JAX f32 reference (lax.conv_general_dilated), independent of the
    sub-pixel decomposition, used to numerically validate the Pallas path."""
    x = z_nchw.astype(jnp.float32)
    for layer in params:
        w = layer["w_raw"]                      # (Cin, Cout, 4, 4)
        K, s, p = 4, layer["stride"], layer["pad"]
        w_f = jnp.transpose(w[:, :, ::-1, ::-1], (1, 0, 2, 3))       # (Cout, Cin, K, K)
        x = jax.lax.conv_general_dilated(
            x, w_f, window_strides=(1, 1),
            padding=[(K - 1 - p, K - 1 - p)] * 2,
            lhs_dilation=(s, s),
            dimension_numbers=("NCHW", "OIHW", "NCHW"))
        if layer["kind"] == "deconv_s2_tanh":
            x = jnp.tanh(x)
        else:
            mean = jnp.mean(x, axis=(0, 2, 3), keepdims=True)
            var = jnp.mean(jnp.square(x - mean), axis=(0, 2, 3), keepdims=True)
            g = layer["gamma"].reshape(1, -1, 1, 1)
            b = layer["beta"].reshape(1, -1, 1, 1)
            x = jnp.maximum(g * (x - mean) * jax.lax.rsqrt(var + _EPS) + b, 0.0)
    return x


# ----------------------------------------------------------------------- main ---
if __name__ == "__main__":
    key = jax.random.PRNGKey(0)
    # Small shapes consistent with the module (img_size must be power of 2 >= 32).
    img_size, latent_dim, base_ch, img_ch, batch = 32, 16, 8, 3, 2

    pkey, zkey = jax.random.split(key)
    params = init_generator_params(pkey, img_size, latent_dim, base_ch, img_ch)
    z = jax.random.normal(zkey, (batch, latent_dim, 1, 1), jnp.float32)

    fwd = jax.jit(lambda zz: generator_forward(params, zz))
    img = fwd(z)
    jax.block_until_ready(img)

    assert img.shape == (batch, img_ch, img_size, img_size), img.shape
    assert bool(jnp.all(jnp.abs(img) <= 1.0 + 1e-6)), "tanh output out of range"

    # Numerical check against a pure-JAX f32 reference (validates the sub-pixel
    # parity/tap mapping and the BatchNorm statistics path; bf16 MXU path tolerance).
    ref = jax.jit(lambda zz: _ref_forward(params, zz))(z)
    jax.block_until_ready(ref)
    max_err = float(jnp.max(jnp.abs(img - ref)))
    mean_err = float(jnp.mean(jnp.abs(img - ref)))
    assert max_err < 0.1 and mean_err < 0.02, (max_err, mean_err)

    print("KERNEL_OK")
</pallas_src>

<mosaic_0001>
module attributes {stable_mosaic.version = 11 : i64} {
  func.func @_mm_stats_kernel(%arg0: i32, %arg1: i32, %arg2: memref<1x32x256xbf16, #tpu.memory_space<vmem>>, %arg3: memref<1x256x32xbf16, #tpu.memory_space<vmem>>, %arg4: memref<1x32x32xbf16, #tpu.memory_space<vmem>>, %arg5: memref<1x1x2x32xf32, #tpu.memory_space<vmem>>) attributes {dimension_semantics = [#tpu.dimension_semantics<parallel>, #tpu.dimension_semantics<parallel>], iteration_bounds = array<i64: 1, 1>, scalar_prefetch = 0 : i64, scratch_operands = 0 : i64, tpu.core_type = #tpu.core_type<tc>, window_params = [{transform_indices = @transform_0, window_bounds = array<i64: 1, 32, 256>}, {transform_indices = @transform_1, window_bounds = array<i64: 1, 256, 32>}, {transform_indices = @transform_2, window_bounds = array<i64: 1, 32, 32>}, {transform_indices = @transform_3, window_bounds = array<i64: 1, 1, 2, 32>}]} {
    %c0 = arith.constant 0 : index
    %c0_0 = arith.constant 0 : index
    %c0_1 = arith.constant 0 : index
    %0 = vector.load %arg2[%c0, %c0_0, %c0_1] : memref<1x32x256xbf16, #tpu.memory_space<vmem>>, vector<1x32x256xbf16>
    %1 = vector.shape_cast %0 : vector<1x32x256xbf16> to vector<32x256xbf16>
    %c0_2 = arith.constant 0 : index
    %c0_3 = arith.constant 0 : index
    %c0_4 = arith.constant 0 : index
    %2 = vector.load %arg3[%c0_2, %c0_3, %c0_4] : memref<1x256x32xbf16, #tpu.memory_space<vmem>>, vector<1x256x32xbf16>
    %3 = vector.shape_cast %2 : vector<1x256x32xbf16> to vector<256x32xbf16>
    %cst = arith.constant dense<0.000000e+00> : vector<32x32xf32>
    %4 = tpu.matmul %1, %3, %cst {dimension_numbers = #tpu.dot_dimension_numbers<[1], [0], [0], [1], [0, 0, 1, 1], [], []>} : vector<32x256xbf16>, vector<256x32xbf16>, vector<32x32xf32> -> vector<32x32xf32>
    %5 = arith.truncf %4 : vector<32x32xf32> to vector<32x32xbf16>
    %c0_5 = arith.constant 0 : index
    %c0_6 = arith.constant 0 : index
    %c0_7 = arith.constant 0 : index
    %6 = vector.load %arg4[%c0_5, %c0_6, %c0_7] : memref<1x32x32xbf16, #tpu.memory_space<vmem>>, vector<1x32x32xbf16>
    %7 = vector.shape_cast %6 : vector<1x32x32xbf16> to vector<32x32xbf16>
    %8 = vector.shape_cast %5 : vector<32x32xbf16> to vector<1x32x32xbf16>
    tpu.vector_store %arg4[%c0_5, %c0_6, %c0_7], %8 {strides = array<i32>} : memref<1x32x32xbf16, #tpu.memory_space<vmem>>, vector<1x32x32xbf16>,
    %cst_8 = arith.constant dense<0.000000e+00> : vector<32xf32>
    %9 = vector.multi_reduction <add>, %4, %cst_8 [0] : vector<32x32xf32> to vector<32xf32>
    %10 = vector.shape_cast %9 : vector<32xf32> to vector<1x32xf32>
    %11 = arith.mulf %4, %4 : vector<32x32xf32>
    %cst_9 = arith.constant dense<0.000000e+00> : vector<32xf32>
    %12 = vector.multi_reduction <add>, %11, %cst_9 [0] : vector<32x32xf32> to vector<32xf32>
    %13 = vector.shape_cast %12 : vector<32xf32> to vector<1x32xf32>
    %14 = tpu.concatenate %10, %13 in 0 : vector<1x32xf32>, vector<1x32xf32> -> vector<2x32xf32>
    %c0_10 = arith.constant 0 : index
    %c0_11 = arith.constant 0 : index
    %c0_12 = arith.constant 0 : index
    %c0_13 = arith.constant 0 : index
    %15 = vector.load %arg5[%c0_10, %c0_11, %c0_12, %c0_13] : memref<1x1x2x32xf32, #tpu.memory_space<vmem>>, vector<1x1x2x32xf32>
    %16 = vector.shape_cast %15 : vector<1x1x2x32xf32> to vector<2x32xf32>
    %17 = vector.shape_cast %14 : vector<2x32xf32> to vector<1x1x2x32xf32>
    tpu.vector_store %arg5[%c0_10, %c0_11, %c0_12, %c0_13], %17 {strides = array<i32>} : memref<1x1x2x32xf32, #tpu.memory_space<vmem>>, vector<1x1x2x32xf32>,
    return
  }
  func.func @transform_0(%arg0: i32, %arg1: i32) -> (i32, i32, i32) {
    %c0_i32 = arith.constant 0 : i32
    %c0_i32_0 = arith.constant 0 : i32
    return %arg0, %arg1, %c0_i32 : i32, i32, i32
  }
  func.func @transform_1(%arg0: i32, %arg1: i32) -> (i32, i32, i32) {
    %c0_i32 = arith.constant 0 : i32
    %c0_i32_0 = arith.constant 0 : i32
    %c0_i32_1 = arith.constant 0 : i32
    return %arg0, %c0_i32, %c0_i32_0 : i32, i32, i32
  }
  func.func @transform_2(%arg0: i32, %arg1: i32) -> (i32, i32, i32) {
    %c0_i32 = arith.constant 0 : i32
    %c0_i32_0 = arith.constant 0 : i32
    return %arg0, %arg1, %c0_i32 : i32, i32, i32
  }
  func.func @transform_3(%arg0: i32, %arg1: i32) -> (i32, i32, i32, i32) {
    %c0_i32 = arith.constant 0 : i32
    %c0_i32_0 = arith.constant 0 : i32
    %c0_i32_1 = arith.constant 0 : i32
    return %arg0, %arg1, %c0_i32, %c0_i32_0 : i32, i32, i32, i32
  }
}

module attributes {stable_mosaic.version = 11 : i64} {
  func.func @_mm_stats_kernel(%arg0: i32, %arg1: i32, %arg2: memref<1x32x128xbf16, #tpu.memory_space<vmem>>, %arg3: memref<1x128x16xbf16, #tpu.memory_space<vmem>>, %arg4: memref<1x32x16xbf16, #tpu.memory_space<vmem>>, %arg5: memref<1x1x2x16xf32, #tpu.memory_space<vmem>>) attributes {dimension_semantics = [#tpu.dimension_semantics<parallel>, #tpu.dimension_semantics<parallel>], iteration_bounds = array<i64: 4, 1>, scalar_prefetch = 0 : i64, scratch_operands = 0 : i64, tpu.core_type = #tpu.core_type<tc>, window_params = [{transform_indices = @transform_0, window_bounds = array<i64: 1, 32, 128>}, {transform_indices = @transform_1, window_bounds = array<i64: 1, 128, 16>}, {transform_indices = @transform_2, window_bounds = array<i64: 1, 32, 16>}, {transform_indices = @transform_3, window_bounds = array<i64: 1, 1, 2, 16>}]} {
    %c0 = arith.constant 0 : index
    %c0_0 = arith.constant 0 : index
    %c0_1 = arith.constant 0 : index
    %0 = vector.load %arg2[%c0, %c0_0, %c0_1] : memref<1x32x128xbf16, #tpu.memory_space<vmem>>, vector<1x32x128xbf16>
    %1 = vector.shape_cast %0 : vector<1x32x128xbf16> to vector<32x128xbf16>
    %c0_2 = arith.constant 0 : index
    %c0_3 = arith.constant 0 : index
    %c0_4 = arith.constant 0 : index
    %2 = vector.load %arg3[%c0_2, %c0_3, %c0_4] : memref<1x128x16xbf16, #tpu.memory_space<vmem>>, vector<1x128x16xbf16>
    %3 = vector.shape_cast %2 : vector<1x128x16xbf16> to vector<128x16xbf16>
    %cst = arith.constant dense<0.000000e+00> : vector<32x16xf32>
    %4 = tpu.matmul %1, %3, %cst {dimension_numbers = #tpu.dot_dimension_numbers<[1], [0], [0], [1], [0, 0, 1, 1], [], []>} : vector<32x128xbf16>, vector<128x16xbf16>, vector<32x16xf32> -> vector<32x16xf32>
    %5 = arith.truncf %4 : vector<32x16xf32> to vector<32x16xbf16>
    %c0_5 = arith.constant 0 : index
    %c0_6 = arith.constant 0 : index
    %c0_7 = arith.constant 0 : index
    %6 = vector.load %arg4[%c0_5, %c0_6, %c0_7] : memref<1x32x16xbf16, #tpu.memory_space<vmem>>, vector<1x32x16xbf16>
    %7 = vector.shape_cast %6 : vector<1x32x16xbf16> to vector<32x16xbf16>
    %8 = vector.shape_cast %5 : vector<32x16xbf16> to vector<1x32x16xbf16>
    tpu.vector_store %arg4[%c0_5, %c0_6, %c0_7], %8 {strides = array<i32>} : memref<1x32x16xbf16, #tpu.memory_space<vmem>>, vector<1x32x16xbf16>,
    %cst_8 = arith.constant dense<0.000000e+00> : vector<16xf32>
    %9 = vector.multi_reduction <add>, %4, %cst_8 [0] : vector<32x16xf32> to vector<16xf32>
    %10 = vector.shape_cast %9 : vector<16xf32> to vector<1x16xf32>
    %11 = arith.mulf %4, %4 : vector<32x16xf32>
    %cst_9 = arith.constant dense<0.000000e+00> : vector<16xf32>
    %12 = vector.multi_reduction <add>, %11, %cst_9 [0] : vector<32x16xf32> to vector<16xf32>
    %13 = vector.shape_cast %12 : vector<16xf32> to vector<1x16xf32>
    %14 = tpu.concatenate %10, %13 in 0 : vector<1x16xf32>, vector<1x16xf32> -> vector<2x16xf32>
    %c0_10 = arith.constant 0 : index
    %c0_11 = arith.constant 0 : index
    %c0_12 = arith.constant 0 : index
    %c0_13 = arith.constant 0 : index
    %15 = vector.load %arg5[%c0_10, %c0_11, %c0_12, %c0_13] : memref<1x1x2x16xf32, #tpu.memory_space<vmem>>, vector<1x1x2x16xf32>
    %16 = vector.shape_cast %15 : vector<1x1x2x16xf32> to vector<2x16xf32>
    %17 = vector.shape_cast %14 : vector<2x16xf32> to vector<1x1x2x16xf32>
    tpu.vector_store %arg5[%c0_10, %c0_11, %c0_12, %c0_13], %17 {strides = array<i32>} : memref<1x1x2x16xf32, #tpu.memory_space<vmem>>, vector<1x1x2x16xf32>,
    return
  }
  func.func @transform_0(%arg0: i32, %arg1: i32) -> (i32, i32, i32) {
    %c0_i32 = arith.constant 0 : i32
    %c0_i32_0 = arith.constant 0 : i32
    return %arg0, %arg1, %c0_i32 : i32, i32, i32
  }
  func.func @transform_1(%arg0: i32, %arg1: i32) -> (i32, i32, i32) {
    %c0_i32 = arith.constant 0 : i32
    %c0_i32_0 = arith.constant 0 : i32
    %c0_i32_1 = arith.constant 0 : i32
    return %arg0, %c0_i32, %c0_i32_0 : i32, i32, i32
  }
  func.func @transform_2(%arg0: i32, %arg1: i32) -> (i32, i32, i32) {
    %c0_i32 = arith.constant 0 : i32
    %c0_i32_0 = arith.constant 0 : i32
    return %arg0, %arg1, %c0_i32 : i32, i32, i32
  }
  func.func @transform_3(%arg0: i32, %arg1: i32) -> (i32, i32, i32, i32) {
    %c0_i32 = arith.constant 0 : i32
    %c0_i32_0 = arith.constant 0 : i32
    %c0_i32_1 = arith.constant 0 : i32
    return %arg0, %arg1, %c0_i32, %c0_i32_0 : i32, i32, i32, i32
  }
}

module attributes {stable_mosaic.version = 11 : i64} {
  func.func @_mm_stats_kernel(%arg0: i32, %arg1: i32, %arg2: memref<1x128x64xbf16, #tpu.memory_space<vmem>>, %arg3: memref<1x64x8xbf16, #tpu.memory_space<vmem>>, %arg4: memref<1x128x8xbf16, #tpu.memory_space<vmem>>, %arg5: memref<1x1x2x8xf32, #tpu.memory_space<vmem>>) attributes {dimension_semantics = [#tpu.dimension_semantics<parallel>, #tpu.dimension_semantics<parallel>], iteration_bounds = array<i64: 4, 1>, scalar_prefetch = 0 : i64, scratch_operands = 0 : i64, tpu.core_type = #tpu.core_type<tc>, window_params = [{transform_indices = @transform_0, window_bounds = array<i64: 1, 128, 64>}, {transform_indices = @transform_1, window_bounds = array<i64: 1, 64, 8>}, {transform_indices = @transform_2, window_bounds = array<i64: 1, 128, 8>}, {transform_indices = @transform_3, window_bounds = array<i64: 1, 1, 2, 8>}]} {
    %c0 = arith.constant 0 : index
    %c0_0 = arith.constant 0 : index
    %c0_1 = arith.constant 0 : index
    %0 = vector.load %arg2[%c0, %c0_0, %c0_1] : memref<1x128x64xbf16, #tpu.memory_space<vmem>>, vector<1x128x64xbf16>
    %1 = vector.shape_cast %0 : vector<1x128x64xbf16> to vector<128x64xbf16>
    %c0_2 = arith.constant 0 : index
    %c0_3 = arith.constant 0 : index
    %c0_4 = arith.constant 0 : index
    %2 = vector.load %arg3[%c0_2, %c0_3, %c0_4] : memref<1x64x8xbf16, #tpu.memory_space<vmem>>, vector<1x64x8xbf16>
    %3 = vector.shape_cast %2 : vector<1x64x8xbf16> to vector<64x8xbf16>
    %cst = arith.constant dense<0.000000e+00> : vector<128x8xf32>
    %4 = tpu.matmul %1, %3, %cst {dimension_numbers = #tpu.dot_dimension_numbers<[1], [0], [0], [1], [0, 0, 1, 1], [], []>} : vector<128x64xbf16>, vector<64x8xbf16>, vector<128x8xf32> -> vector<128x8xf32>
    %5 = arith.truncf %4 : vector<128x8xf32> to vector<128x8xbf16>
    %c0_5 = arith.constant 0 : index
    %c0_6 = arith.constant 0 : index
    %c0_7 = arith.constant 0 : index
    %6 = vector.load %arg4[%c0_5, %c0_6, %c0_7] : memref<1x128x8xbf16, #tpu.memory_space<vmem>>, vector<1x128x8xbf16>
    %7 = vector.shape_cast %6 : vector<1x128x8xbf16> to vector<128x8xbf16>
    %8 = vector.shape_cast %5 : vector<128x8xbf16> to vector<1x128x8xbf16>
    tpu.vector_store %arg4[%c0_5, %c0_6, %c0_7], %8 {strides = array<i32>} : memref<1x128x8xbf16, #tpu.memory_space<vmem>>, vector<1x128x8xbf16>,
    %cst_8 = arith.constant dense<0.000000e+00> : vector<8xf32>
    %9 = vector.multi_reduction <add>, %4, %cst_8 [0] : vector<128x8xf32> to vector<8xf32>
    %10 = vector.shape_cast %9 : vector<8xf32> to vector<1x8xf32>
    %11 = arith.mulf %4, %4 : vector<128x8xf32>
    %cst_9 = arith.constant dense<0.000000e+00> : vector<8xf32>
    %12 = vector.multi_reduction <add>, %11, %cst_9 [0] : vector<128x8xf32> to vector<8xf32>
    %13 = vector.shape_cast %12 : vector<8xf32> to vector<1x8xf32>
    %14 = tpu.concatenate %10, %13 in 0 : vector<1x8xf32>, vector<1x8xf32> -> vector<2x8xf32>
    %c0_10 = arith.constant 0 : index
    %c0_11 = arith.constant 0 : index
    %c0_12 = arith.constant 0 : index
    %c0_13 = arith.constant 0 : index
    %15 = vector.load %arg5[%c0_10, %c0_11, %c0_12, %c0_13] : memref<1x1x2x8xf32, #tpu.memory_space<vmem>>, vector<1x1x2x8xf32>
    %16 = vector.shape_cast %15 : vector<1x1x2x8xf32> to vector<2x8xf32>
    %17 = vector.shape_cast %14 : vector<2x8xf32> to vector<1x1x2x8xf32>
    tpu.vector_store %arg5[%c0_10, %c0_11, %c0_12, %c0_13], %17 {strides = array<i32>} : memref<1x1x2x8xf32, #tpu.memory_space<vmem>>, vector<1x1x2x8xf32>,
    return
  }
  func.func @transform_0(%arg0: i32, %arg1: i32) -> (i32, i32, i32) {
    %c0_i32 = arith.constant 0 : i32
    %c0_i32_0 = arith.constant 0 : i32
    return %arg0, %arg1, %c0_i32 : i32, i32, i32
  }
  func.func @transform_1(%arg0: i32, %arg1: i32) -> (i32, i32, i32) {
    %c0_i32 = arith.constant 0 : i32
    %c0_i32_0 = arith.constant 0 : i32
    %c0_i32_1 = arith.constant 0 : i32
    return %arg0, %c0_i32, %c0_i32_0 : i32, i32, i32
  }
  func.func @transform_2(%arg0: i32, %arg1: i32) -> (i32, i32, i32) {
    %c0_i32 = arith.constant 0 : i32
    %c0_i32_0 = arith.constant 0 : i32
    return %arg0, %arg1, %c0_i32 : i32, i32, i32
  }
  func.func @transform_3(%arg0: i32, %arg1: i32) -> (i32, i32, i32, i32) {
    %c0_i32 = arith.constant 0 : i32
    %c0_i32_0 = arith.constant 0 : i32
    %c0_i32_1 = arith.constant 0 : i32
    return %arg0, %arg1, %c0_i32, %c0_i32_0 : i32, i32, i32, i32
  }
}

module attributes {stable_mosaic.version = 11 : i64} {
  func.func @_mm_tanh_kernel(%arg0: i32, %arg1: i32, %arg2: memref<1x512x32xbf16, #tpu.memory_space<vmem>>, %arg3: memref<1x32x3xbf16, #tpu.memory_space<vmem>>, %arg4: memref<1x512x3xf32, #tpu.memory_space<vmem>>) attributes {dimension_semantics = [#tpu.dimension_semantics<parallel>, #tpu.dimension_semantics<parallel>], iteration_bounds = array<i64: 4, 1>, scalar_prefetch = 0 : i64, scratch_operands = 0 : i64, tpu.core_type = #tpu.core_type<tc>, window_params = [{transform_indices = @transform_0, window_bounds = array<i64: 1, 512, 32>}, {transform_indices = @transform_1, window_bounds = array<i64: 1, 32, 3>}, {transform_indices = @transform_2, window_bounds = array<i64: 1, 512, 3>}]} {
    %c0 = arith.constant 0 : index
    %c0_0 = arith.constant 0 : index
    %c0_1 = arith.constant 0 : index
    %0 = vector.load %arg2[%c0, %c0_0, %c0_1] : memref<1x512x32xbf16, #tpu.memory_space<vmem>>, vector<1x512x32xbf16>
    %1 = vector.shape_cast %0 : vector<1x512x32xbf16> to vector<512x32xbf16>
    %c0_2 = arith.constant 0 : index
    %c0_3 = arith.constant 0 : index
    %c0_4 = arith.constant 0 : index
    %2 = vector.load %arg3[%c0_2, %c0_3, %c0_4] : memref<1x32x3xbf16, #tpu.memory_space<vmem>>, vector<1x32x3xbf16>
    %3 = vector.shape_cast %2 : vector<1x32x3xbf16> to vector<32x3xbf16>
    %cst = arith.constant dense<0.000000e+00> : vector<512x3xf32>
    %4 = tpu.matmul %1, %3, %cst {dimension_numbers = #tpu.dot_dimension_numbers<[1], [0], [0], [1], [0, 0, 1, 1], [], []>} : vector<512x32xbf16>, vector<32x3xbf16>, vector<512x3xf32> -> vector<512x3xf32>
    %5 = math.tanh %4 : vector<512x3xf32>
    %c0_5 = arith.constant 0 : index
    %c0_6 = arith.constant 0 : index
    %c0_7 = arith.constant 0 : index
    %6 = vector.load %arg4[%c0_5, %c0_6, %c0_7] : memref<1x512x3xf32, #tpu.memory_space<vmem>>, vector<1x512x3xf32>
    %7 = vector.shape_cast %6 : vector<1x512x3xf32> to vector<512x3xf32>
    %8 = vector.shape_cast %5 : vector<512x3xf32> to vector<1x512x3xf32>
    tpu.vector_store %arg4[%c0_5, %c0_6, %c0_7], %8 {strides = array<i32>} : memref<1x512x3xf32, #tpu.memory_space<vmem>>, vector<1x512x3xf32>,
    return
  }
  func.func @transform_0(%arg0: i32, %arg1: i32) -> (i32, i32, i32) {
    %c0_i32 = arith.constant 0 : i32
    %c0_i32_0 = arith.constant 0 : i32
    return %arg0, %arg1, %c0_i32 : i32, i32, i32
  }
  func.func @transform_1(%arg0: i32, %arg1: i32) -> (i32, i32, i32) {
    %c0_i32 = arith.constant 0 : i32
    %c0_i32_0 = arith.constant 0 : i32
    %c0_i32_1 = arith.constant 0 : i32
    return %arg0, %c0_i32, %c0_i32_0 : i32, i32, i32
  }
  func.func @transform_2(%arg0: i32, %arg1: i32) -> (i32, i32, i32) {
    %c0_i32 = arith.constant 0 : i32
    %c0_i32_0 = arith.constant 0 : i32
    return %arg0, %arg1, %c0_i32 : i32, i32, i32
  }
}

</mosaic_0001>

<llo_original>
// kernel: _lambda_.4
$region0: #{_lambda_.4}
  #allocation0 [shape = 'u32[]', space=smem, size = 0x4, offset = 0x4, fixed_abs, tag = 'smem constant byte address 0x4 - core index']
  #allocation1 [shape = 'u32[144,128]{1,0:T(1,128)}', space=vmem, size = 0x12000, scoped, tag = 'internal scratch']
  %s0 = inlined_call_operand.vmem [shape: bf16[1,32,256], index: 0, kind: input, shape index: {}]
  %s1 = inlined_call_operand.hbm [shape: bf16[1,256,32], index: 1, kind: input, shape index: {}]
  %s2 = inlined_call_operand.vmem [shape: bf16[1,32,32], index: 2, kind: output, shape index: {0}]
  %s3 = inlined_call_operand.vmem [shape: f32[1,1,2,32], index: 3, kind: output, shape index: {1}]
  %4 = xla_tuple %s2, %s3
  %s5 = sld [smem:[#allocation0]]
  $region30: #{_lambda_.4} parent=0
    _
  %s7 = ssub.s32 1, %s5
  %s8 = scalar_select 0, %s7, %s5
  $region1: #{_lambda_.4} parent=0
    #allocation2 [shape = 'u8[65536]{0}', space=vmem, size = 0x10000, scoped, tag = 'input window, operand 1, single buffered']
    #allocation3 [shape = 's32[1]{0}', space=sflag, size = 0x4, scoped, tag = 'scoped memory for _lambda_.4']
    %9 = vsyncpa [#allocation3], 0
    // Predicated region
    $region2: #{_lambda_.4} parent=1 // pred_check
      _
    $region3: #{_lambda_.4} parent=1 // pred_check_branch
      %11 = sbr.rel (0) target = $region5
    $region4: #{_lambda_.4} parent=1 // pred_region
      _
    $region5: #{_lambda_.4} parent=1 // pred_fallthru
      _
    // Predicated region
    $region6: #{_lambda_.4} parent=1 // pred_check
      _
    $region7: #{_lambda_.4} parent=1 // pred_check_branch
      %13 = sbr.rel (0) target = $region9
    $region8: #{_lambda_.4} parent=1 // pred_region
      %s15 = ssub.s32 2048, 2048
      %16 = vsyncadd [#allocation3], %s15
      %s17 = sshll.u32 [#allocation2], 4
      %s18 = int_to_ptr.vmem [resolvable:$true] %s17
      %23 = dma.hbm_to_vmem [thread:$0]  %s1, 2048, %s18, [#allocation3], 64, 64, 4
    $region9: #{_lambda_.4} parent=1 // pred_fallthru
      _
    // Predicated region
    $region10: #{_lambda_.4} parent=1 // pred_check
      _
    $region11: #{_lambda_.4} parent=1 // pred_check_branch
      %25 = sbr.rel (0) target = $region13
    $region12: #{_lambda_.4} parent=1 // pred_region
      %26 = dma.done [#allocation3], 2048
    $region13: #{_lambda_.4} parent=1 // pred_fallthru
      _
    %v28 = vld [vmem:[%s0] sm:$0xff]
    %v29 = vld [vmem:[%s0 + $0x8] sm:$0xff]
    %v30 = vld [vmem:[%s0 + $0x10] sm:$0xff]
    %v31 = vld [vmem:[%s0 + $0x18] sm:$0xff]
    %v32 = vld [vmem:[#allocation2] sm:$0xf]
    %v33 = vld [vmem:[#allocation2 + $0x4] sm:$0xf]
    %v34 = vld [vmem:[#allocation2 + $0x8] sm:$0xf]
    %v35 = vld [vmem:[#allocation2 + $0xc] sm:$0xf]
    %v36 = vld [vmem:[#allocation2 + $0x10] sm:$0xf]
    %v37 = vld [vmem:[#allocation2 + $0x14] sm:$0xf]
    %v38 = vld [vmem:[#allocation2 + $0x18] sm:$0xf]
    %v39 = vld [vmem:[#allocation2 + $0x1c] sm:$0xf]
    %v40 = vld [vmem:[#allocation2 + $0x20] sm:$0xf]
    %v41 = vld [vmem:[#allocation2 + $0x24] sm:$0xf]
    %v42 = vld [vmem:[#allocation2 + $0x28] sm:$0xf]
    %v43 = vld [vmem:[#allocation2 + $0x2c] sm:$0xf]
    %v44 = vld [vmem:[#allocation2 + $0x30] sm:$0xf]
    %v45 = vld [vmem:[#allocation2 + $0x34] sm:$0xf]
    %v46 = vld [vmem:[#allocation2 + $0x38] sm:$0xf]
    %v47 = vld [vmem:[#allocation2 + $0x3c] sm:$0xf]
    %v48 = vld [vmem:[#allocation2 + $0x40] sm:$0xf]
    %v49 = vld [vmem:[#allocation2 + $0x44] sm:$0xf]
    %v50 = vld [vmem:[#allocation2 + $0x48] sm:$0xf]
    %v51 = vld [vmem:[#allocation2 + $0x4c] sm:$0xf]
    %v52 = vld [vmem:[#allocation2 + $0x50] sm:$0xf]
    %v53 = vld [vmem:[#allocation2 + $0x54] sm:$0xf]
    %v54 = vld [vmem:[#allocation2 + $0x58] sm:$0xf]
    %v55 = vld [vmem:[#allocation2 + $0x5c] sm:$0xf]
    %v56 = vld [vmem:[#allocation2 + $0x60] sm:$0xf]
    %v57 = vld [vmem:[#allocation2 + $0x64] sm:$0xf]
    %v58 = vld [vmem:[#allocation2 + $0x68] sm:$0xf]
    %v59 = vld [vmem:[#allocation2 + $0x6c] sm:$0xf]
    %v60 = vld [vmem:[#allocation2 + $0x70] sm:$0xf]
    %v61 = vld [vmem:[#allocation2 + $0x74] sm:$0xf]
    %v62 = vld [vmem:[#allocation2 + $0x78] sm:$0xf]
    %v63 = vld [vmem:[#allocation2 + $0x7c] sm:$0xf]
    %v68 = vunpack.c.l.b16 %v28
    %v69 = vunpack.c.h.b16 %v28
    %v70 = vunpack.c.l.b16 %v29
    %v71 = vunpack.c.h.b16 %v29
    %v72 = vunpack.c.l.b16 %v30
    %v73 = vunpack.c.h.b16 %v30
    %v74 = vunpack.c.l.b16 %v31
    %v75 = vunpack.c.h.b16 %v31
    %v76 = vpack.c.b16 %v70, %v68
    %v77 = vpack.c.b16 %v71, %v69
    %v78 = vpack.c.b16 %v74, %v72
    %v79 = vpack.c.b16 %v75, %v73
    %v116 = vunpack.c.l.b16 %v32
    %v117 = vunpack.c.l.b16 %v33
    %v118 = vunpack.c.l.b16 %v34
    %v119 = vunpack.c.l.b16 %v35
    %v120 = vunpack.c.l.b16 %v36
    %v121 = vunpack.c.l.b16 %v37
    %v122 = vunpack.c.l.b16 %v38
    %v123 = vunpack.c.l.b16 %v39
    %v124 = vunpack.c.l.b16 %v40
    %v125 = vunpack.c.l.b16 %v41
    %v126 = vunpack.c.l.b16 %v42
    %v127 = vunpack.c.l.b16 %v43
    %v128 = vunpack.c.l.b16 %v44
    %v129 = vunpack.c.l.b16 %v45
    %v130 = vunpack.c.l.b16 %v46
    %v131 = vunpack.c.l.b16 %v47
    %v132 = vunpack.c.l.b16 %v48
    %v133 = vunpack.c.l.b16 %v49
    %v134 = vunpack.c.l.b16 %v50
    %v135 = vunpack.c.l.b16 %v51
    %v136 = vunpack.c.l.b16 %v52
    %v137 = vunpack.c.l.b16 %v53
    %v138 = vunpack.c.l.b16 %v54
    %v139 = vunpack.c.l.b16 %v55
    %v140 = vunpack.c.l.b16 %v56
    %v141 = vunpack.c.l.b16 %v57
    %v142 = vunpack.c.l.b16 %v58
    %v143 = vunpack.c.l.b16 %v59
    %v144 = vunpack.c.l.b16 %v60
    %v145 = vunpack.c.l.b16 %v61
    %v146 = vunpack.c.l.b16 %v62
    %v147 = vunpack.c.l.b16 %v63
    %v148 = vpack.c.b16 %v117, %v116
    %v149 = vpack.c.b16 %v119, %v118
    %v150 = vpack.c.b16 %v121, %v120
    %v151 = vpack.c.b16 %v123, %v122
    %v152 = vpack.c.b16 %v125, %v124
    %v153 = vpack.c.b16 %v127, %v126
    %v154 = vpack.c.b16 %v129, %v128
    %v155 = vpack.c.b16 %v131, %v130
    %v156 = vpack.c.b16 %v133, %v132
    %v157 = vpack.c.b16 %v135, %v134
    %v158 = vpack.c.b16 %v137, %v136
    %v159 = vpack.c.b16 %v139, %v138
    %v160 = vpack.c.b16 %v141, %v140
    %v161 = vpack.c.b16 %v143, %v142
    %v162 = vpack.c.b16 %v145, %v144
    %v163 = vpack.c.b16 %v147, %v146
    %180 = vmatprep.subr.bf16.mxu0 0
    %181 = vmatpush1.bf16.msra.mxu0 %v148
    %182 = vmatprep.subr.bf16.mxu0 0
    %183 = vmatpush1.bf16.msra.mxu0 %v149
    %184 = vmatprep.subr.bf16.mxu0 0
    %185 = vmatpush1.bf16.msra.mxu0 %v150
    %186 = vmatprep.subr.bf16.mxu0 0
    %187 = vmatpush1.bf16.msra.mxu0 %v151
    %188 = vmatprep.subr.bf16.mxu0 0
    %189 = vmatpush1.bf16.msra.mxu0 %v152
    %190 = vmatprep.subr.bf16.mxu0 0
    %191 = vmatpush1.bf16.msra.mxu0 %v153
    %192 = vmatprep.subr.bf16.mxu0 0
    %193 = vmatpush1.bf16.msra.mxu0 %v154
    %194 = vmatprep.subr.bf16.mxu0 0
    %195 = vmatpush1.bf16.msra.mxu0 %v155
    %196 = vmatprep.subr.bf16.mxu0 0
    %197 = vmatpush1.bf16.msra.mxu0 %v156
    %198 = vmatprep.subr.bf16.mxu0 0
    %199 = vmatpush1.bf16.msra.mxu0 %v157
    %200 = vmatprep.subr.bf16.mxu0 0
    %201 = vmatpush1.bf16.msra.mxu0 %v158
    %202 = vmatprep.subr.bf16.mxu0 0
    %203 = vmatpush1.bf16.msra.mxu0 %v159
    %204 = vmatprep.subr.bf16.mxu0 0
    %205 = vmatpush1.bf16.msra.mxu0 %v160
    %206 = vmatprep.subr.bf16.mxu0 0
    %207 = vmatpush1.bf16.msra.mxu0 %v161
    %208 = vmatprep.subr.bf16.mxu0 0
    %209 = vmatpush1.bf16.msra.mxu0 %v162
    %210 = vmatprep.subr.bf16.mxu0 0
    %211 = vmatpush1.bf16.msra.mxu0 %v163
    %212 = vmatprep.mubr.bf16.mxu0 %v77
    %213 = vmatmul.mubr.bf16.gmra.mrb[0].mxu0 %v76
    %v214 = vpop.f32.mrb[0].mxu0
    %v215 = vadd.f32 0.0, %v214
    %v216 = vpop.f32.mrb[0].mxu0
    %v217 = vpop.f32.mrb[0].mxu0
    %v218 = vadd.f32 0.0, %v217
    %v219 = vpop.f32.mrb[0].mxu0
    %220 = vmatprep.mubr.bf16.mxu0 %v79
    %221 = vmatmul.mubr.bf16.gmra.mrb[0].mxu0 %v78
    %v222 = vpop.f32.mrb[0].mxu0
    %v223 = vadd.f32 0.0, %v222
    %v224 = vpop.f32.mrb[0].mxu0
    %v225 = vpop.f32.mrb[0].mxu0
    %v226 = vadd.f32 0.0, %v225
    %v227 = vpop.f32.mrb[0].mxu0
    %228 = vdwg.mxu0
    %v229 = vpack.c.bf16 %v218, %v215
    %v230 = vpack.c.bf16 %v226, %v223
    %v233 = vunpack.c.l.b16 %v229
    %v234 = vunpack.c.h.b16 %v229
    %v235 = vunpack.c.l.b16 %v230
    %v236 = vunpack.c.h.b16 %v230
    %v237 = vpack.c.b16 %v233, %v233
    %v238 = vpack.c.b16 %v234, %v234
    %v239 = vpack.c.b16 %v235, %v235
    %v240 = vpack.c.b16 %v236, %v236
    %vm245 = vcmask 257024
    %246 = vst.msk [vmem:[%s2] sm:$0xf] %vm245, %v237
    %247 = vst.msk [vmem:[%s2 + $0x4] sm:$0xf] %vm245, %v238
    %248 = vst.msk [vmem:[%s2 + $0x8] sm:$0xf] %vm245, %v239
    %249 = vst.msk [vmem:[%s2 + $0xc] sm:$0xf] %vm245, %v240
    %vm250 = vcmask 261120
    %v251 = vsel %vm250, %v215, 0.0
    %v252 = vsel %vm250, %v218, 0.0
    %v253 = vadd.f32 %v251, %v252
    %v254 = vsel %vm250, %v223, 0.0
    %v255 = vadd.f32 %v253, %v254
    %v256 = vsel %vm250, %v226, 0.0
    %v257 = vadd.f32 %v255, %v256
    %v258 = vrot.slane %v257, 4
    %v259 = vadd.f32 %v257, %v258
    %v260 = vrot.slane %v259, 2
    %v261 = vadd.f32 %v259, %v260
    %v262 = vrot.slane %v261, 1
    %v263 = vadd.f32 %v261, %v262
    %v264 = vmul.f32 %v215, %v215
    %v265 = vmul.f32 %v218, %v218
    %v266 = vmul.f32 %v223, %v223
    %v267 = vmul.f32 %v226, %v226
    %v268 = vsel %vm250, %v264, 0.0
    %v269 = vsel %vm250, %v265, 0.0
    %v270 = vadd.f32 %v268, %v269
    %v271 = vsel %vm250, %v266, 0.0
    %v272 = vadd.f32 %v270, %v271
    %v273 = vsel %vm250, %v267, 0.0
    %v274 = vadd.f32 %v272, %v273
    %v275 = vrot.slane %v274, 4
    %v276 = vadd.f32 %v274, %v275
    %v277 = vrot.slane %v276, 2
    %v278 = vadd.f32 %v276, %v277
    %v279 = vrot.slane %v278, 1
    %v280 = vadd.f32 %v278, %v279
    %vm281 = vcmask 1040384
    %v282 = vsel %vm281, %v263, %v280
    %vm283 = vcmask 254976
    %284 = vst.msk [vmem:[%s3] sm:$0x3] %vm283, %v282
    // Predicated region
    $region14: #{_lambda_.4} parent=1 // pred_check
      _
    $region15: #{_lambda_.4} parent=1 // pred_check_branch
      %286 = sbr.rel (0) target = $region17
    $region16: #{_lambda_.4} parent=1 // pred_region
      _
    $region17: #{_lambda_.4} parent=1 // pred_fallthru
      _
    // Predicated region
    $region18: #{_lambda_.4} parent=1 // pred_check
      _
    $region19: #{_lambda_.4} parent=1 // pred_check_branch
      %288 = sbr.rel (0) target = $region21
    $region20: #{_lambda_.4} parent=1 // pred_region
      _
    $region21: #{_lambda_.4} parent=1 // pred_fallthru
      _
    // Predicated region
    $region22: #{_lambda_.4} parent=1 // pred_check
      _
    $region23: #{_lambda_.4} parent=1 // pred_check_branch
      %290 = sbr.rel (0) target = $region25
    $region24: #{_lambda_.4} parent=1 // pred_region
      _
    $region25: #{_lambda_.4} parent=1 // pred_fallthru
      _
    // Predicated region
    $region26: #{_lambda_.4} parent=1 // pred_check
      _
    $region27: #{_lambda_.4} parent=1 // pred_check_branch
      %292 = sbr.rel (0) target = $region29
    $region28: #{_lambda_.4} parent=1 // pred_region
      _
    $region29: #{_lambda_.4} parent=1 // pred_fallthru
      _
    %293 = vsyncpa [#allocation3], 1

// kernel: _lambda_.5
$region0: #{_lambda_.5}
  #allocation0 [shape = 'u32[]', space=smem, size = 0x4, offset = 0x4, fixed_abs, tag = 'smem constant byte address 0x4 - core index']
  #allocation1 [shape = 'u32[144,128]{1,0:T(1,128)}', space=vmem, size = 0x12000, scoped, tag = 'internal scratch']
  %s0 = inlined_call_operand.vmem [shape: bf16[4,32,128], index: 0, kind: input, shape index: {}]
  %s1 = inlined_call_operand.hbm [shape: bf16[4,128,16], index: 1, kind: input, shape index: {}]
  %s2 = inlined_call_operand.vmem [shape: bf16[4,32,16], index: 2, kind: output, shape index: {0}]
  %s3 = inlined_call_operand.vmem [shape: f32[4,1,2,16], index: 3, kind: output, shape index: {1}]
  %4 = xla_tuple %s2, %s3
  %s5 = sld [smem:[#allocation0]]
  $region53: #{_lambda_.5} parent=0
    _
  %s7 = ssub.s32 1, %s5
  %s8 = scalar_select 0, %s7, %s5
  $region1: #{_lambda_.5} parent=0
    #allocation2 [shape = 'u8[65536]{0}', space=vmem, size = 0x10000, scoped, tag = 'input window, operand 1']
    #allocation3 [shape = 's32[2]{0}', space=sflag, size = 0x8, scoped, tag = 'scoped memory for _lambda_.5']
    %9 = vsyncpa [#allocation3], 0
    %s10 = scalar_lea.sflag [#allocation3], 1
    %11 = vsyncpa %s10, 0
    loop: start=0, step=1, limit=6
    $region2: #{_lambda_.5} parent=1 // loop_pre_header
      _
    $region3: #{_lambda_.5} parent=1 // loop_header
      %s13 = sphi 0, %s17
      %p14 = scmp.ge.s32.totalorder %s13, 6
      %s20 = sphi 0, %s32
      %s21 = sphi 0, %s28
      %s22 = sphi 0, %s20
      %s23 = sphi 0, %s21
      %s24 = sphi 0, %s22
      %s25 = sphi 0, %s23
      %s37 = sphi 0, %s39
      %s40 = sphi 0, %s37
      %s41 = sphi 0, %s40
      %s57 = sphi 0, %s41
      %s63 = sphi 0, %s65
      %s66 = sphi 0, %s63
      %s67 = sphi 0, %s66
      %s83 = sphi 0, %s67
      %s91 = sphi 0, %s93
      %s94 = sphi 0, %s91
      %s95 = sphi 0, %s94
      %s111 = sphi 0, %s95
      %s119 = sphi 0, %s121
      %s122 = sphi 0, %s119
      %s123 = sphi 0, %s122
      %s139 = sphi 0, %s123
    $region4: #{_lambda_.5} parent=1 // loop_header_branch
      %16 = sbr.rel (%p14) target = $region8
    $region5: #{_lambda_.5} parent=1 // loop_body
      %s18 = ssub.s32 %s13, 1
      %s19 = ssub.s32 %s13, 2
      %s26 = sadd.s32 1, %s21
      %p27 = scmp.ge.s32.totalorder %s26, 1
      %s28 = scalar_select %p27, 0, %s26
      %s29 = sadd.s32 1, %s20
      %s30 = scalar_select %p27, %s29, %s20
      %p31 = scmp.ge.s32.totalorder %s30, 4
      %s32 = scalar_select %p31, 0, %s30
      %s33 = ssub.s32 %s20, %s32
      %s34 = ssub.s32 %s21, %s28
      %s35 = sor.u32 %s33, %s34
      %p36 = scmp.eq.s32.totalorder %s35, 0
      %s38 = sadd.s32 %s37, 1
      %s39 = scalar_select %p36, %s37, %s38
      %p42 = pneg %p36
      %p43 = scmp.eq.s32.totalorder %s13, 3
      %p44 = por %p42, %p43
      %p45 = scmp.ne.s32.totalorder %s37, %s40
      %p46 = scmp.eq.s32.totalorder %s13, 0
      %p47 = por %p45, %p46
      %p48 = scmp.ne.s32.totalorder %s37, %s40
      %p49 = scmp.eq.s32.totalorder %s18, 3
      %p50 = por %p48, %p49
      %p51 = scmp.ne.s32.totalorder %s40, %s41
      %p52 = scmp.eq.s32.totalorder %s18, 0
      %p53 = por %p51, %p52
      %p54 = scmp.ne.s32.totalorder %s40, %s41
      %p55 = scmp.eq.s32.totalorder %s19, 3
      %p56 = por %p54, %p55
      %p58 = scmp.ne.s32.totalorder %s41, %s57
      %p59 = scmp.eq.s32.totalorder %s19, 0
      %p60 = por %p58, %p59
      %s61 = ssub.s32 %s20, %s32
      %p62 = scmp.eq.s32.totalorder %s61, 0
      %s64 = sadd.s32 %s63, 1
      %s65 = scalar_select %p62, %s63, %s64
      %p68 = pneg %p62
      %p69 = scmp.eq.s32.totalorder %s13, 3
      %p70 = por %p68, %p69
      %p71 = scmp.ne.s32.totalorder %s63, %s66
      %p72 = scmp.eq.s32.totalorder %s13, 0
      %p73 = por %p71, %p72
      %p74 = scmp.ne.s32.totalorder %s63, %s66
      %p75 = scmp.eq.s32.totalorder %s18, 3
      %p76 = por %p74, %p75
      %p77 = scmp.ne.s32.totalorder %s66, %s67
      %p78 = scmp.eq.s32.totalorder %s18, 0
      %p79 = por %p77, %p78
      %p80 = scmp.ne.s32.totalorder %s66, %s67
      %p81 = scmp.eq.s32.totalorder %s19, 3
      %p82 = por %p80, %p81
      %p84 = scmp.ne.s32.totalorder %s67, %s83
      %p85 = scmp.eq.s32.totalorder %s19, 0
      %p86 = por %p84, %p85
      %s87 = ssub.s32 %s20, %s32
      %s88 = ssub.s32 %s21, %s28
      %s89 = sor.u32 %s87, %s88
      %p90 = scmp.eq.s32.totalorder %s89, 0
      %s92 = sadd.s32 %s91, 1
      %s93 = scalar_select %p90, %s91, %s92
      %p96 = pneg %p90
      %p97 = scmp.eq.s32.totalorder %s13, 3
      %p98 = por %p96, %p97
      %p99 = scmp.ne.s32.totalorder %s91, %s94
      %p100 = scmp.eq.s32.totalorder %s13, 0
      %p101 = por %p99, %p100
      %p102 = scmp.ne.s32.totalorder %s91, %s94
      %p103 = scmp.eq.s32.totalorder %s18, 3
      %p104 = por %p102, %p103
      %p105 = scmp.ne.s32.totalorder %s94, %s95
      %p106 = scmp.eq.s32.totalorder %s18, 0
      %p107 = por %p105, %p106
      %p108 = scmp.ne.s32.totalorder %s94, %s95
      %p109 = scmp.eq.s32.totalorder %s19, 3
      %p110 = por %p108, %p109
      %p112 = scmp.ne.s32.totalorder %s95, %s111
      %p113 = scmp.eq.s32.totalorder %s19, 0
      %p114 = por %p112, %p113
      %s115 = ssub.s32 %s20, %s32
      %s116 = ssub.s32 %s21, %s28
      %s117 = sor.u32 %s115, %s116
      %p118 = scmp.eq.s32.totalorder %s117, 0
      %s120 = sadd.s32 %s119, 1
      %s121 = scalar_select %p118, %s119, %s120
      %p124 = pneg %p118
      %p125 = scmp.eq.s32.totalorder %s13, 3
      %p126 = por %p124, %p125
      %p127 = scmp.ne.s32.totalorder %s119, %s122
      %p128 = scmp.eq.s32.totalorder %s13, 0
      %p129 = por %p127, %p128
      %p130 = scmp.ne.s32.totalorder %s119, %s122
      %p131 = scmp.eq.s32.totalorder %s18, 3
      %p132 = por %p130, %p131
      %p133 = scmp.ne.s32.totalorder %s122, %s123
      %p134 = scmp.eq.s32.totalorder %s18, 0
      %p135 = por %p133, %p134
      %p136 = scmp.ne.s32.totalorder %s122, %s123
      %p137 = scmp.eq.s32.totalorder %s19, 3
      %p138 = por %p136, %p137
      %p140 = scmp.ne.s32.totalorder %s123, %s139
      %p141 = scmp.eq.s32.totalorder %s19, 0
      %p142 = por %p140, %p141
      %p143 = scmp.le.s32.totalorder 1, %s13
      %p144 = scmp.lt.s32.totalorder %s13, 5
      %p145 = pnand %p143, %p144
      %p146 = pneg %p145
      // Predicated region
      $region9: #{_lambda_.5} parent=5 // pred_check
        _
      $region10: #{_lambda_.5} parent=5 // pred_check_branch
        %148 = sbr.rel (%p145) target = $region12
      $region11: #{_lambda_.5} parent=5 // pred_region
        %s149 = ssub.s32 %s13, 1
      $region12: #{_lambda_.5} parent=5 // pred_fallthru
        _
      %p150 = scmp.lt.s32.totalorder %s13, 4
      // Predicated region
      $region13: #{_lambda_.5} parent=5 // pred_check
        %p151 = pneg %p150
      $region14: #{_lambda_.5} parent=5 // pred_check_branch
        %153 = sbr.rel (%p151) target = $region16
      $region15: #{_lambda_.5} parent=5 // pred_region
        // Predicated region
        $region17: #{_lambda_.5} parent=15 // pred_check
          %p154 = pneg %p47
        $region18: #{_lambda_.5} parent=15 // pred_check_branch
          %156 = sbr.rel (%p154) target = $region20
        $region19: #{_lambda_.5} parent=15 // pred_region
          %s157 = smul.u32 4, %s21
          %p158 = scmp.lt.s32.totalorder %s20, 3
          %s159 = scalar_select %p158, %s20, 3
          %p160 = scmp.lt.s32.totalorder %s157, 3
          %s161 = scalar_select %p160, %s157, 3
          %s162 = smul.addr %s159, 4
          %s163 = sadd.s32 %s161, %s162
          %s164 = smul.addr %s163, 4
          %s165 = scalar_lea.vmem %s0, %s164
          %s166 = smul.u32 4, %s21
        $region20: #{_lambda_.5} parent=15 // pred_fallthru
          _
        // Predicated region
        $region21: #{_lambda_.5} parent=15 // pred_check
          %p167 = pneg %p73
        $region22: #{_lambda_.5} parent=15 // pred_check_branch
          %169 = sbr.rel (%p167) target = $region24
        $region23: #{_lambda_.5} parent=15 // pred_region
          %s170 = sand.u32 %s63, 1
          %s171 = scalar_lea.sflag [#allocation3], %s170
          %s172 = sand.u32 %s63, 1
          %s173 = smul.addr %s172, 64
          %s174 = scalar_lea.vmem [#allocation2], %s173
          %s176 = ssub.s32 1024, 1024
          %177 = vsyncadd %s171, %s176
          %s178 = smul.addr %s20, 16
          %s179 = smul.addr %s178, 64
          %s180 = scalar_lea.hbm %s1, %s179
          %s181 = sshll.u32 %s174, 4
          %s182 = int_to_ptr.vmem [resolvable:$true] %s181
          %187 = dma.hbm_to_vmem [thread:$0]  %s180, 1024, %s182, %s171, 64, 64, 4
        $region24: #{_lambda_.5} parent=15 // pred_fallthru
          _
      $region16: #{_lambda_.5} parent=5 // pred_fallthru
        _
      %p188 = scmp.le.s32.totalorder 1, %s13
      %p189 = scmp.lt.s32.totalorder %s13, 5
      %p190 = pnand %p188, %p189
      %p191 = pneg %p190
      // Predicated region
      $region25: #{_lambda_.5} parent=5 // pred_check
        _
      $region26: #{_lambda_.5} parent=5 // pred_check_branch
        %193 = sbr.rel (%p190) target = $region28
      $region27: #{_lambda_.5} parent=5 // pred_region
        %s194 = ssub.s32 %s13, 1
        %s195 = sand.u32 %s66, 1
        %s196 = scalar_lea.sflag [#allocation3], %s195
        %s197 = sand.u32 %s66, 1
        %s198 = smul.addr %s197, 64
        %s199 = scalar_lea.vmem [#allocation2], %s198
        // Predicated region
        $region29: #{_lambda_.5} parent=27 // pred_check
          %p200 = pneg %p79
        $region30: #{_lambda_.5} parent=27 // pred_check_branch
          %202 = sbr.rel (%p200) target = $region32
        $region31: #{_lambda_.5} parent=27 // pred_region
          %203 = dma.done %s196, 1024
        $region32: #{_lambda_.5} parent=27 // pred_fallthru
          _
        %s204 = smul.u32 4, %s23
        %p205 = scmp.lt.s32.totalorder %s22, 3
        %s206 = scalar_select %p205, %s22, 3
        %p207 = scmp.lt.s32.totalorder %s204, 3
        %s208 = scalar_select %p207, %s204, 3
        %s209 = smul.addr %s206, 4
        %s210 = sadd.s32 %s208, %s209
        %s211 = smul.addr %s210, 4
        %s212 = scalar_lea.vmem %s0, %s211
        %p213 = pneg %p53
        %p214 = pneg %p50
        %s215 = sand.u32 %s66, 1
        %s216 = scalar_lea.sflag [#allocation3], %s215
        %s217 = sand.u32 %s66, 1
        %s218 = smul.addr %s217, 64
        %s219 = scalar_lea.vmem [#allocation2], %s218
        %p220 = pneg %p79
        %p221 = pneg %p76
        %p222 = pneg %p107
        %p223 = pneg %p104
        %s224 = smul.u32 4, %s23
        %p225 = scmp.lt.s32.totalorder %s22, 3
        %s226 = scalar_select %p225, %s22, 3
        %p227 = scmp.lt.s32.totalorder %s224, 3
        %s228 = scalar_select %p227, %s224, 3
        %s229 = smul.addr %s226, 4
        %s230 = sadd.s32 %s228, %s229
        %s231 = smul.addr %s230, 4
        %s232 = scalar_lea.vmem %s2, %s231
        %p233 = pneg %p135
        %p234 = pneg %p132
        %p235 = scmp.lt.s32.totalorder %s22, 3
        %s236 = scalar_select %p235, %s22, 3
        %p237 = scmp.lt.s32.totalorder %s23, 0
        %s238 = scalar_select %p237, %s23, 0
        %s239 = sadd.s32 %s238, %s236
        %s240 = smul.addr %s239, 2
        %s241 = scalar_lea.vmem %s3, %s240
        %s242 = smul.u32 4, %s23
        %p243 = scmp.lt.s32.totalorder %s22, 3
        %s244 = scalar_select %p243, %s22, 3
        %p245 = scmp.lt.s32.totalorder %s242, 3
        %s246 = scalar_select %p245, %s242, 3
        %s247 = smul.addr %s244, 4
        %s248 = sadd.s32 %s246, %s247
        %s249 = smul.addr %s248, 4
        %s250 = scalar_lea.vmem %s0, %s249
        %s251 = smul.u32 4, %s23
        %s252 = smul.u32 4, %s23
        %p253 = scmp.lt.s32.totalorder %s22, 3
        %s254 = scalar_select %p253, %s22, 3
        %p255 = scmp.lt.s32.totalorder %s252, 3
        %s256 = scalar_select %p255, %s252, 3
        %s257 = smul.addr %s254, 4
        %s258 = sadd.s32 %s256, %s257
        %s259 = smul.addr %s258, 4
        %s260 = scalar_lea.vmem %s2, %s259
        %s261 = smul.u32 4, %s23
        %p262 = scmp.lt.s32.totalorder %s22, 3
        %s263 = scalar_select %p262, %s22, 3
        %p264 = scmp.lt.s32.totalorder %s23, 0
        %s265 = scalar_select %p264, %s23, 0
        %s266 = sadd.s32 %s265, %s263
        %s267 = smul.addr %s266, 2
        %s268 = scalar_lea.vmem %s3, %s267
        %v270 = vld [vmem:[%s250] sm:$0xf]
        %v271 = vld [vmem:[%s250 + $0x4] sm:$0xf]
        %v272 = vld [vmem:[%s250 + $0x8] sm:$0xf]
        %v273 = vld [vmem:[%s250 + $0xc] sm:$0xf]
        %v274 = vld [vmem:[%s199] sm:$0xf]
        %v275 = vld [vmem:[%s199 + $0x4] sm:$0xf]
        %v276 = vld [vmem:[%s199 + $0x8] sm:$0xf]
        %v277 = vld [vmem:[%s199 + $0xc] sm:$0xf]
        %v278 = vld [vmem:[%s199 + $0x10] sm:$0xf]
        %v279 = vld [vmem:[%s199 + $0x14] sm:$0xf]
        %v280 = vld [vmem:[%s199 + $0x18] sm:$0xf]
        %v281 = vld [vmem:[%s199 + $0x1c] sm:$0xf]
        %v282 = vld [vmem:[%s199 + $0x20] sm:$0xf]
        %v283 = vld [vmem:[%s199 + $0x24] sm:$0xf]
        %v284 = vld [vmem:[%s199 + $0x28] sm:$0xf]
        %v285 = vld [vmem:[%s199 + $0x2c] sm:$0xf]
        %v286 = vld [vmem:[%s199 + $0x30] sm:$0xf]
        %v287 = vld [vmem:[%s199 + $0x34] sm:$0xf]
        %v288 = vld [vmem:[%s199 + $0x38] sm:$0xf]
        %v289 = vld [vmem:[%s199 + $0x3c] sm:$0xf]
        %v294 = vunpack.c.l.b16 %v270
        %v295 = vunpack.c.l.b16 %v271
        %v296 = vunpack.c.l.b16 %v272
        %v297 = vunpack.c.l.b16 %v273
        %v298 = vpack.c.b16 %v295, %v294
        %v299 = vpack.c.b16 %v297, %v296
        %v318 = vunpack.c.l.b16 %v274
        %v319 = vunpack.c.l.b16 %v275
        %v320 = vunpack.c.l.b16 %v276
        %v321 = vunpack.c.l.b16 %v277
        %v322 = vunpack.c.l.b16 %v278
        %v323 = vunpack.c.l.b16 %v279
        %v324 = vunpack.c.l.b16 %v280
        %v325 = vunpack.c.l.b16 %v281
        %v326 = vunpack.c.l.b16 %v282
        %v327 = vunpack.c.l.b16 %v283
        %v328 = vunpack.c.l.b16 %v284
        %v329 = vunpack.c.l.b16 %v285
        %v330 = vunpack.c.l.b16 %v286
        %v331 = vunpack.c.l.b16 %v287
        %v332 = vunpack.c.l.b16 %v288
        %v333 = vunpack.c.l.b16 %v289
        %v334 = vpack.c.b16 %v319, %v318
        %v335 = vpack.c.b16 %v321, %v320
        %v336 = vpack.c.b16 %v323, %v322
        %v337 = vpack.c.b16 %v325, %v324
        %v338 = vpack.c.b16 %v327, %v326
        %v339 = vpack.c.b16 %v329, %v328
        %v340 = vpack.c.b16 %v331, %v330
        %v341 = vpack.c.b16 %v333, %v332
        %350 = vmatprep.subr.bf16.mxu0 0
        %351 = vmatpush1.bf16.msra.mxu0 %v334
        %352 = vmatprep.subr.bf16.mxu0 0
        %353 = vmatpush1.bf16.msra.mxu0 %v335
        %354 = vmatprep.subr.bf16.mxu0 0
        %355 = vmatpush1.bf16.msra.mxu0 %v336
        %356 = vmatprep.subr.bf16.mxu0 0
        %357 = vmatpush1.bf16.msra.mxu0 %v337
        %358 = vmatprep.subr.bf16.mxu0 0
        %359 = vmatpush1.bf16.msra.mxu0 %v338
        %360 = vmatprep.subr.bf16.mxu0 0
        %361 = vmatpush1.bf16.msra.mxu0 %v339
        %362 = vmatprep.subr.bf16.mxu0 0
        %363 = vmatpush1.bf16.msra.mxu0 %v340
        %364 = vmatprep.subr.bf16.mxu0 0
        %365 = vmatpush1.bf16.msra.mxu0 %v341
        %366 = vmatprep.subr.bf16.mxu0 0
        %367 = vmatpush1.bf16.msra.mxu0 0
        %368 = vmatprep.subr.bf16.mxu0 0
        %369 = vmatpush1.bf16.msra.mxu0 0
        %370 = vmatprep.subr.bf16.mxu0 0
        %371 = vmatpush1.bf16.msra.mxu0 0
        %372 = vmatprep.subr.bf16.mxu0 0
        %373 = vmatpush1.bf16.msra.mxu0 0
        %374 = vmatprep.subr.bf16.mxu0 0
        %375 = vmatpush1.bf16.msra.mxu0 0
        %376 = vmatprep.subr.bf16.mxu0 0
        %377 = vmatpush1.bf16.msra.mxu0 0
        %378 = vmatprep.subr.bf16.mxu0 0
        %379 = vmatpush1.bf16.msra.mxu0 0
        %380 = vmatprep.subr.bf16.mxu0 0
        %381 = vmatpush1.bf16.msra.mxu0 0
        %382 = vmatprep.mubr.bf16.mxu0 0
        %383 = vmatmul.mubr.bf16.gmra.mrb[0].mxu0 %v298
        %v384 = vpop.f32.mrb[0].mxu0
        %v385 = vadd.f32 0.0, %v384
        %v386 = vpop.f32.mrb[0].mxu0
        %v387 = vpop.f32.mrb[0].mxu0
        %v388 = vadd.f32 0.0, %v387
        %v389 = vpop.f32.mrb[0].mxu0
        %390 = vmatprep.mubr.bf16.mxu0 0
        %391 = vmatmul.mubr.bf16.gmra.mrb[0].mxu0 %v299
        %v392 = vpop.f32.mrb[0].mxu0
        %v393 = vadd.f32 0.0, %v392
        %v394 = vpop.f32.mrb[0].mxu0
        %v395 = vpop.f32.mrb[0].mxu0
        %v396 = vadd.f32 0.0, %v395
        %v397 = vpop.f32.mrb[0].mxu0
        %398 = vdwg.mxu0
        %v399 = vpack.c.bf16 %v388, %v385
        %v400 = vpack.c.bf16 %v396, %v393
        %v403 = vunpack.c.l.b16 %v399
        %v404 = vunpack.c.h.b16 %v399
        %v405 = vunpack.c.l.b16 %v400
        %v406 = vunpack.c.h.b16 %v400
        %v407 = vpack.c.b16 %v403, %v403
        %v408 = vpack.c.b16 %v404, %v404
        %v409 = vpack.c.b16 %v405, %v405
        %v410 = vpack.c.b16 %v406, %v406
        %vm415 = vcmask 125952
        %416 = vst.msk [vmem:[%s260] sm:$0xf] %vm415, %v407
        %417 = vst.msk [vmem:[%s260 + $0x4] sm:$0xf] %vm415, %v408
        %418 = vst.msk [vmem:[%s260 + $0x8] sm:$0xf] %vm415, %v409
        %419 = vst.msk [vmem:[%s260 + $0xc] sm:$0xf] %vm415, %v410
        %vm420 = vcmask 130048
        %v421 = vsel %vm420, %v385, 0.0
        %v422 = vsel %vm420, %v388, 0.0
        %v423 = vadd.f32 %v421, %v422
        %v424 = vsel %vm420, %v393, 0.0
        %v425 = vadd.f32 %v423, %v424
        %v426 = vsel %vm420, %v396, 0.0
        %v427 = vadd.f32 %v425, %v426
        %v428 = vrot.slane %v427, 4
        %v429 = vadd.f32 %v427, %v428
        %v430 = vrot.slane %v429, 2
        %v431 = vadd.f32 %v429, %v430
        %v432 = vrot.slane %v431, 1
        %v433 = vadd.f32 %v431, %v432
        %v434 = vmul.f32 %v385, %v385
        %v435 = vmul.f32 %v388, %v388
        %v436 = vmul.f32 %v393, %v393
        %v437 = vmul.f32 %v396, %v396
        %v438 = vsel %vm420, %v434, 0.0
        %v439 = vsel %vm420, %v435, 0.0
        %v440 = vadd.f32 %v438, %v439
        %v441 = vsel %vm420, %v436, 0.0
        %v442 = vadd.f32 %v440, %v441
        %v443 = vsel %vm420, %v437, 0.0
        %v444 = vadd.f32 %v442, %v443
        %v445 = vrot.slane %v444, 4
        %v446 = vadd.f32 %v444, %v445
        %v447 = vrot.slane %v446, 2
        %v448 = vadd.f32 %v446, %v447
        %v449 = vrot.slane %v448, 1
        %v450 = vadd.f32 %v448, %v449
        %vm451 = vcmask 1040384
        %v452 = vsel %vm451, %v433, %v450
        %vm453 = vcmask 123904
        %454 = vst.msk [vmem:[%s268] sm:$0x3] %vm453, %v452
        %s455 = smul.u32 4, %s23
        %p456 = scmp.lt.s32.totalorder %s22, 3
        %s457 = scalar_select %p456, %s22, 3
        %p458 = scmp.lt.s32.totalorder %s455, 3
        %s459 = scalar_select %p458, %s455, 3
        %s460 = smul.addr %s457, 4
        %s461 = sadd.s32 %s459, %s460
        %s462 = smul.addr %s461, 4
        %s463 = scalar_lea.vmem %s2, %s462
        %p464 = scmp.lt.s32.totalorder %s22, 3
        %s465 = scalar_select %p464, %s22, 3
        %p466 = scmp.lt.s32.totalorder %s23, 0
        %s467 = scalar_select %p466, %s23, 0
        %s468 = sadd.s32 %s467, %s465
        %s469 = smul.addr %s468, 2
        %s470 = scalar_lea.vmem %s3, %s469
        // Predicated region
        $region33: #{_lambda_.5} parent=27 // pred_check
          %p471 = pneg %p104
        $region34: #{_lambda_.5} parent=27 // pred_check_branch
          %473 = sbr.rel (%p471) target = $region36
        $region35: #{_lambda_.5} parent=27 // pred_region
          %s474 = smul.u32 4, %s23
        $region36: #{_lambda_.5} parent=27 // pred_fallthru
          _
        // Predicated region
        $region37: #{_lambda_.5} parent=27 // pred_check
          %p475 = pneg %p132
        $region38: #{_lambda_.5} parent=27 // pred_check_branch
          %477 = sbr.rel (%p475) target = $region40
        $region39: #{_lambda_.5} parent=27 // pred_region
          _
        $region40: #{_lambda_.5} parent=27 // pred_fallthru
          _
      $region28: #{_lambda_.5} parent=5 // pred_fallthru
        _
      %p478 = scmp.le.s32.totalorder 2, %s13
      // Predicated region
      $region41: #{_lambda_.5} parent=5 // pred_check
        %p479 = pneg %p478
      $region42: #{_lambda_.5} parent=5 // pred_check_branch
        %481 = sbr.rel (%p479) target = $region44
      $region43: #{_lambda_.5} parent=5 // pred_region
        %s482 = ssub.s32 %s13, 2
        // Predicated region
        $region45: #{_lambda_.5} parent=43 // pred_check
          %p483 = pneg %p110
        $region46: #{_lambda_.5} parent=43 // pred_check_branch
          %485 = sbr.rel (%p483) target = $region48
        $region47: #{_lambda_.5} parent=43 // pred_region
          %s486 = smul.u32 4, %s25
          %p487 = scmp.lt.s32.totalorder %s24, 3
          %s488 = scalar_select %p487, %s24, 3
          %p489 = scmp.lt.s32.totalorder %s486, 3
          %s490 = scalar_select %p489, %s486, 3
          %s491 = smul.addr %s488, 4
          %s492 = sadd.s32 %s490, %s491
          %s493 = smul.addr %s492, 4
          %s494 = scalar_lea.vmem %s2, %s493
        $region48: #{_lambda_.5} parent=43 // pred_fallthru
          _
        // Predicated region
        $region49: #{_lambda_.5} parent=43 // pred_check
          %p495 = pneg %p138
        $region50: #{_lambda_.5} parent=43 // pred_check_branch
          %497 = sbr.rel (%p495) target = $region52
        $region51: #{_lambda_.5} parent=43 // pred_region
          %p498 = scmp.lt.s32.totalorder %s24, 3
          %s499 = scalar_select %p498, %s24, 3
          %p500 = scmp.lt.s32.totalorder %s25, 0
          %s501 = scalar_select %p500, %s25, 0
          %s502 = sadd.s32 %s501, %s499
          %s503 = smul.addr %s502, 2
          %s504 = scalar_lea.vmem %s3, %s503
        $region52: #{_lambda_.5} parent=43 // pred_fallthru
          _
      $region44: #{_lambda_.5} parent=5 // pred_fallthru
        _
    $region6: #{_lambda_.5} parent=1 // loop_footer
      %s17 = sadd.s32 1, %s13
    $region7: #{_lambda_.5} parent=1 // loop_footer_branch
      %12 = sbr.rel target = $region3
    $region8: #{_lambda_.5} parent=1 // loop_exit
      _
    %505 = vsyncpa [#allocation3], 1
    %s506 = scalar_lea.sflag [#allocation3], 1
    %507 = vsyncpa %s506, 1

// kernel: _lambda_.6
$region0: #{_lambda_.6}
  #allocation0 [shape = 'u32[]', space=smem, size = 0x4, offset = 0x4, fixed_abs, tag = 'smem constant byte address 0x4 - core index']
  #allocation1 [shape = 'u32[144,128]{1,0:T(1,128)}', space=vmem, size = 0x12000, scoped, tag = 'internal scratch']
  %s0 = inlined_call_operand.vmem [shape: bf16[4,128,64], index: 0, kind: input, shape index: {}]
  %s1 = inlined_call_operand.vmem [shape: bf16[4,64,8], index: 1, kind: input, shape index: {}]
  %s2 = inlined_call_operand.vmem [shape: bf16[4,128,8], index: 2, kind: output, shape index: {0}]
  %s3 = inlined_call_operand.vmem [shape: f32[4,1,2,8], index: 3, kind: output, shape index: {1}]
  %4 = xla_tuple %s2, %s3
  %s5 = sld [smem:[#allocation0]]
  $region49: #{_lambda_.6} parent=0
    _
  %s7 = ssub.s32 1, %s5
  %s8 = scalar_select 0, %s7, %s5
  loop: start=0, step=1, limit=6
  $region2: #{_lambda_.6} parent=0 // loop_pre_header
    _
  $region3: #{_lambda_.6} parent=0 // loop_header
    %s10 = sphi 0, %s14
    %p11 = scmp.ge.s32.totalorder %s10, 6
    %s17 = sphi 0, %s29
    %s18 = sphi 0, %s25
    %s19 = sphi 0, %s17
    %s20 = sphi 0, %s18
    %s21 = sphi 0, %s19
    %s22 = sphi 0, %s20
    %s34 = sphi 0, %s36
    %s37 = sphi 0, %s34
    %s38 = sphi 0, %s37
    %s54 = sphi 0, %s38
    %s60 = sphi 0, %s62
    %s63 = sphi 0, %s60
    %s64 = sphi 0, %s63
    %s80 = sphi 0, %s64
    %s88 = sphi 0, %s90
    %s91 = sphi 0, %s88
    %s92 = sphi 0, %s91
    %s108 = sphi 0, %s92
    %s116 = sphi 0, %s118
    %s119 = sphi 0, %s116
    %s120 = sphi 0, %s119
    %s136 = sphi 0, %s120
  $region4: #{_lambda_.6} parent=0 // loop_header_branch
    %13 = sbr.rel (%p11) target = $region8
  $region5: #{_lambda_.6} parent=0 // loop_body
    %s15 = ssub.s32 %s10, 1
    %s16 = ssub.s32 %s10, 2
    %s23 = sadd.s32 1, %s18
    %p24 = scmp.ge.s32.totalorder %s23, 1
    %s25 = scalar_select %p24, 0, %s23
    %s26 = sadd.s32 1, %s17
    %s27 = scalar_select %p24, %s26, %s17
    %p28 = scmp.ge.s32.totalorder %s27, 4
    %s29 = scalar_select %p28, 0, %s27
    %s30 = ssub.s32 %s17, %s29
    %s31 = ssub.s32 %s18, %s25
    %s32 = sor.u32 %s30, %s31
    %p33 = scmp.eq.s32.totalorder %s32, 0
    %s35 = sadd.s32 %s34, 1
    %s36 = scalar_select %p33, %s34, %s35
    %p39 = pneg %p33
    %p40 = scmp.eq.s32.totalorder %s10, 3
    %p41 = por %p39, %p40
    %p42 = scmp.ne.s32.totalorder %s34, %s37
    %p43 = scmp.eq.s32.totalorder %s10, 0
    %p44 = por %p42, %p43
    %p45 = scmp.ne.s32.totalorder %s34, %s37
    %p46 = scmp.eq.s32.totalorder %s15, 3
    %p47 = por %p45, %p46
    %p48 = scmp.ne.s32.totalorder %s37, %s38
    %p49 = scmp.eq.s32.totalorder %s15, 0
    %p50 = por %p48, %p49
    %p51 = scmp.ne.s32.totalorder %s37, %s38
    %p52 = scmp.eq.s32.totalorder %s16, 3
    %p53 = por %p51, %p52
    %p55 = scmp.ne.s32.totalorder %s38, %s54
    %p56 = scmp.eq.s32.totalorder %s16, 0
    %p57 = por %p55, %p56
    %s58 = ssub.s32 %s17, %s29
    %p59 = scmp.eq.s32.totalorder %s58, 0
    %s61 = sadd.s32 %s60, 1
    %s62 = scalar_select %p59, %s60, %s61
    %p65 = pneg %p59
    %p66 = scmp.eq.s32.totalorder %s10, 3
    %p67 = por %p65, %p66
    %p68 = scmp.ne.s32.totalorder %s60, %s63
    %p69 = scmp.eq.s32.totalorder %s10, 0
    %p70 = por %p68, %p69
    %p71 = scmp.ne.s32.totalorder %s60, %s63
    %p72 = scmp.eq.s32.totalorder %s15, 3
    %p73 = por %p71, %p72
    %p74 = scmp.ne.s32.totalorder %s63, %s64
    %p75 = scmp.eq.s32.totalorder %s15, 0
    %p76 = por %p74, %p75
    %p77 = scmp.ne.s32.totalorder %s63, %s64
    %p78 = scmp.eq.s32.totalorder %s16, 3
    %p79 = por %p77, %p78
    %p81 = scmp.ne.s32.totalorder %s64, %s80
    %p82 = scmp.eq.s32.totalorder %s16, 0
    %p83 = por %p81, %p82
    %s84 = ssub.s32 %s17, %s29
    %s85 = ssub.s32 %s18, %s25
    %s86 = sor.u32 %s84, %s85
    %p87 = scmp.eq.s32.totalorder %s86, 0
    %s89 = sadd.s32 %s88, 1
    %s90 = scalar_select %p87, %s88, %s89
    %p93 = pneg %p87
    %p94 = scmp.eq.s32.totalorder %s10, 3
    %p95 = por %p93, %p94
    %p96 = scmp.ne.s32.totalorder %s88, %s91
    %p97 = scmp.eq.s32.totalorder %s10, 0
    %p98 = por %p96, %p97
    %p99 = scmp.ne.s32.totalorder %s88, %s91
    %p100 = scmp.eq.s32.totalorder %s15, 3
    %p101 = por %p99, %p100
    %p102 = scmp.ne.s32.totalorder %s91, %s92
    %p103 = scmp.eq.s32.totalorder %s15, 0
    %p104 = por %p102, %p103
    %p105 = scmp.ne.s32.totalorder %s91, %s92
    %p106 = scmp.eq.s32.totalorder %s16, 3
    %p107 = por %p105, %p106
    %p109 = scmp.ne.s32.totalorder %s92, %s108
    %p110 = scmp.eq.s32.totalorder %s16, 0
    %p111 = por %p109, %p110
    %s112 = ssub.s32 %s17, %s29
    %s113 = ssub.s32 %s18, %s25
    %s114 = sor.u32 %s112, %s113
    %p115 = scmp.eq.s32.totalorder %s114, 0
    %s117 = sadd.s32 %s116, 1
    %s118 = scalar_select %p115, %s116, %s117
    %p121 = pneg %p115
    %p122 = scmp.eq.s32.totalorder %s10, 3
    %p123 = por %p121, %p122
    %p124 = scmp.ne.s32.totalorder %s116, %s119
    %p125 = scmp.eq.s32.totalorder %s10, 0
    %p126 = por %p124, %p125
    %p127 = scmp.ne.s32.totalorder %s116, %s119
    %p128 = scmp.eq.s32.totalorder %s15, 3
    %p129 = por %p127, %p128
    %p130 = scmp.ne.s32.totalorder %s119, %s120
    %p131 = scmp.eq.s32.totalorder %s15, 0
    %p132 = por %p130, %p131
    %p133 = scmp.ne.s32.totalorder %s119, %s120
    %p134 = scmp.eq.s32.totalorder %s16, 3
    %p135 = por %p133, %p134
    %p137 = scmp.ne.s32.totalorder %s120, %s136
    %p138 = scmp.eq.s32.totalorder %s16, 0
    %p139 = por %p137, %p138
    %p140 = scmp.le.s32.totalorder 1, %s10
    %p141 = scmp.lt.s32.totalorder %s10, 5
    %p142 = pnand %p140, %p141
    %p143 = pneg %p142
    // Predicated region
    $region9: #{_lambda_.6} parent=5 // pred_check
      _
    $region10: #{_lambda_.6} parent=5 // pred_check_branch
      %145 = sbr.rel (%p142) target = $region12
    $region11: #{_lambda_.6} parent=5 // pred_region
      %s146 = ssub.s32 %s10, 1
    $region12: #{_lambda_.6} parent=5 // pred_fallthru
      _
    %p147 = scmp.lt.s32.totalorder %s10, 4
    // Predicated region
    $region13: #{_lambda_.6} parent=5 // pred_check
      %p148 = pneg %p147
    $region14: #{_lambda_.6} parent=5 // pred_check_branch
      %150 = sbr.rel (%p148) target = $region16
    $region15: #{_lambda_.6} parent=5 // pred_region
      // Predicated region
      $region17: #{_lambda_.6} parent=15 // pred_check
        %p151 = pneg %p44
      $region18: #{_lambda_.6} parent=15 // pred_check_branch
        %153 = sbr.rel (%p151) target = $region20
      $region19: #{_lambda_.6} parent=15 // pred_region
        %s154 = smul.u32 16, %s18
        %p155 = scmp.lt.s32.totalorder %s17, 3
        %s156 = scalar_select %p155, %s17, 3
        %p157 = scmp.lt.s32.totalorder %s154, 15
        %s158 = scalar_select %p157, %s154, 15
        %s159 = smul.addr %s156, 16
        %s160 = sadd.s32 %s158, %s159
        %s161 = smul.addr %s160, 4
        %s162 = scalar_lea.vmem %s0, %s161
        %s163 = smul.u32 16, %s18
      $region20: #{_lambda_.6} parent=15 // pred_fallthru
        _
      // Predicated region
      $region21: #{_lambda_.6} parent=15 // pred_check
        %p164 = pneg %p70
      $region22: #{_lambda_.6} parent=15 // pred_check_branch
        %166 = sbr.rel (%p164) target = $region24
      $region23: #{_lambda_.6} parent=15 // pred_region
        %p167 = scmp.lt.s32.totalorder %s17, 3
        %s168 = scalar_select %p167, %s17, 3
        %s169 = smul.addr %s168, 8
        %s170 = smul.addr %s169, 4
        %s171 = scalar_lea.vmem %s1, %s170
      $region24: #{_lambda_.6} parent=15 // pred_fallthru
        _
    $region16: #{_lambda_.6} parent=5 // pred_fallthru
      _
    %p172 = scmp.le.s32.totalorder 1, %s10
    %p173 = scmp.lt.s32.totalorder %s10, 5
    %p174 = pnand %p172, %p173
    %p175 = pneg %p174
    // Predicated region
    $region25: #{_lambda_.6} parent=5 // pred_check
      _
    $region26: #{_lambda_.6} parent=5 // pred_check_branch
      %177 = sbr.rel (%p174) target = $region28
    $region27: #{_lambda_.6} parent=5 // pred_region
      %s178 = ssub.s32 %s10, 1
      %s179 = smul.u32 16, %s20
      %p180 = scmp.lt.s32.totalorder %s19, 3
      %s181 = scalar_select %p180, %s19, 3
      %p182 = scmp.lt.s32.totalorder %s179, 15
      %s183 = scalar_select %p182, %s179, 15
      %s184 = smul.addr %s181, 16
      %s185 = sadd.s32 %s183, %s184
      %s186 = smul.addr %s185, 4
      %s187 = scalar_lea.vmem %s0, %s186
      %p188 = pneg %p50
      %p189 = pneg %p47
      %p190 = scmp.lt.s32.totalorder %s19, 3
      %s191 = scalar_select %p190, %s19, 3
      %s192 = smul.addr %s191, 8
      %s193 = smul.addr %s192, 4
      %s194 = scalar_lea.vmem %s1, %s193
      %p195 = pneg %p76
      %p196 = pneg %p73
      %p197 = pneg %p104
      %p198 = pneg %p101
      %s199 = smul.u32 16, %s20
      %p200 = scmp.lt.s32.totalorder %s19, 3
      %s201 = scalar_select %p200, %s19, 3
      %p202 = scmp.lt.s32.totalorder %s199, 15
      %s203 = scalar_select %p202, %s199, 15
      %s204 = smul.addr %s201, 16
      %s205 = sadd.s32 %s203, %s204
      %s206 = smul.addr %s205, 4
      %s207 = scalar_lea.vmem %s2, %s206
      %p208 = pneg %p132
      %p209 = pneg %p129
      %p210 = scmp.lt.s32.totalorder %s19, 3
      %s211 = scalar_select %p210, %s19, 3
      %p212 = scmp.lt.s32.totalorder %s20, 0
      %s213 = scalar_select %p212, %s20, 0
      %s214 = sadd.s32 %s213, %s211
      %s215 = smul.addr %s214, 2
      %s216 = scalar_lea.vmem %s3, %s215
      %s217 = smul.u32 16, %s20
      %p218 = scmp.lt.s32.totalorder %s19, 3
      %s219 = scalar_select %p218, %s19, 3
      %p220 = scmp.lt.s32.totalorder %s217, 15
      %s221 = scalar_select %p220, %s217, 15
      %s222 = smul.addr %s219, 16
      %s223 = sadd.s32 %s221, %s222
      %s224 = smul.addr %s223, 4
      %s225 = scalar_lea.vmem %s0, %s224
      %s226 = smul.u32 16, %s20
      %p227 = scmp.lt.s32.totalorder %s19, 3
      %s228 = scalar_select %p227, %s19, 3
      %s229 = smul.addr %s228, 8
      %s230 = smul.addr %s229, 4
      %s231 = scalar_lea.vmem %s1, %s230
      %s232 = smul.u32 16, %s20
      %p233 = scmp.lt.s32.totalorder %s19, 3
      %s234 = scalar_select %p233, %s19, 3
      %p235 = scmp.lt.s32.totalorder %s232, 15
      %s236 = scalar_select %p235, %s232, 15
      %s237 = smul.addr %s234, 16
      %s238 = sadd.s32 %s236, %s237
      %s239 = smul.addr %s238, 4
      %s240 = scalar_lea.vmem %s2, %s239
      %s241 = smul.u32 16, %s20
      %p242 = scmp.lt.s32.totalorder %s19, 3
      %s243 = scalar_select %p242, %s19, 3
      %p244 = scmp.lt.s32.totalorder %s20, 0
      %s245 = scalar_select %p244, %s20, 0
      %s246 = sadd.s32 %s245, %s243
      %s247 = smul.addr %s246, 2
      %s248 = scalar_lea.vmem %s3, %s247
      %v250 = vld [vmem:[%s225] sm:$0xf]
      %v251 = vld [vmem:[%s225 + $0x4] sm:$0xf]
      %v252 = vld [vmem:[%s225 + $0x8] sm:$0xf]
      %v253 = vld [vmem:[%s225 + $0xc] sm:$0xf]
      %v254 = vld [vmem:[%s225 + $0x10] sm:$0xf]
      %v255 = vld [vmem:[%s225 + $0x14] sm:$0xf]
      %v256 = vld [vmem:[%s225 + $0x18] sm:$0xf]
      %v257 = vld [vmem:[%s225 + $0x1c] sm:$0xf]
      %v258 = vld [vmem:[%s225 + $0x20] sm:$0xf]
      %v259 = vld [vmem:[%s225 + $0x24] sm:$0xf]
      %v260 = vld [vmem:[%s225 + $0x28] sm:$0xf]
      %v261 = vld [vmem:[%s225 + $0x2c] sm:$0xf]
      %v262 = vld [vmem:[%s225 + $0x30] sm:$0xf]
      %v263 = vld [vmem:[%s225 + $0x34] sm:$0xf]
      %v264 = vld [vmem:[%s225 + $0x38] sm:$0xf]
      %v265 = vld [vmem:[%s225 + $0x3c] sm:$0xf]
      %v266 = vld [vmem:[%s231] sm:$0xf]
      %v267 = vld [vmem:[%s231 + $0x4] sm:$0xf]
      %v268 = vld [vmem:[%s231 + $0x8] sm:$0xf]
      %v269 = vld [vmem:[%s231 + $0xc] sm:$0xf]
      %v270 = vld [vmem:[%s231 + $0x10] sm:$0xf]
      %v271 = vld [vmem:[%s231 + $0x14] sm:$0xf]
      %v272 = vld [vmem:[%s231 + $0x18] sm:$0xf]
      %v273 = vld [vmem:[%s231 + $0x1c] sm:$0xf]
      %v290 = vunpack.c.l.b16 %v250
      %v291 = vunpack.c.l.b16 %v251
      %v292 = vunpack.c.l.b16 %v252
      %v293 = vunpack.c.l.b16 %v253
      %v294 = vunpack.c.l.b16 %v254
      %v295 = vunpack.c.l.b16 %v255
      %v296 = vunpack.c.l.b16 %v256
      %v297 = vunpack.c.l.b16 %v257
      %v298 = vunpack.c.l.b16 %v258
      %v299 = vunpack.c.l.b16 %v259
      %v300 = vunpack.c.l.b16 %v260
      %v301 = vunpack.c.l.b16 %v261
      %v302 = vunpack.c.l.b16 %v262
      %v303 = vunpack.c.l.b16 %v263
      %v304 = vunpack.c.l.b16 %v264
      %v305 = vunpack.c.l.b16 %v265
      %v306 = vpack.c.b16 %v291, %v290
      %v307 = vpack.c.b16 %v293, %v292
      %v308 = vpack.c.b16 %v295, %v294
      %v309 = vpack.c.b16 %v297, %v296
      %v310 = vpack.c.b16 %v299, %v298
      %v311 = vpack.c.b16 %v301, %v300
      %v312 = vpack.c.b16 %v303, %v302
      %v313 = vpack.c.b16 %v305, %v304
      %v322 = vunpack.c.l.b16 %v266
      %v323 = vunpack.c.l.b16 %v267
      %v324 = vunpack.c.l.b16 %v268
      %v325 = vunpack.c.l.b16 %v269
      %v326 = vunpack.c.l.b16 %v270
      %v327 = vunpack.c.l.b16 %v271
      %v328 = vunpack.c.l.b16 %v272
      %v329 = vunpack.c.l.b16 %v273
      %v330 = vpack.c.b16 %v323, %v322
      %v331 = vpack.c.b16 %v325, %v324
      %v332 = vpack.c.b16 %v327, %v326
      %v333 = vpack.c.b16 %v329, %v328
      %vm338 = vcmask 523264
      %v340 = vsel %vm338, %v306, 0
      %v343 = vsel %vm338, %v307, 0
      %v346 = vsel %vm338, %v308, 0
      %v349 = vsel %vm338, %v309, 0
      %v352 = vsel %vm338, %v310, 0
      %v355 = vsel %vm338, %v311, 0
      %v358 = vsel %vm338, %v312, 0
      %v361 = vsel %vm338, %v313, 0
      %363 = vmatprep.subr.bf16.mxu0 0
      %364 = vmatpush1.bf16.msra.mxu0 %v330
      %365 = vmatprep.subr.bf16.mxu0 0
      %366 = vmatpush1.bf16.msra.mxu0 %v331
      %367 = vmatprep.subr.bf16.mxu0 0
      %368 = vmatpush1.bf16.msra.mxu0 %v332
      %369 = vmatprep.subr.bf16.mxu0 0
      %370 = vmatpush1.bf16.msra.mxu0 %v333
      %371 = vmatprep.subr.bf16.mxu0 0
      %372 = vmatpush1.bf16.msra.mxu0 0
      %373 = vmatprep.subr.bf16.mxu0 0
      %374 = vmatpush1.bf16.msra.mxu0 0
      %375 = vmatprep.subr.bf16.mxu0 0
      %376 = vmatpush1.bf16.msra.mxu0 0
      %377 = vmatprep.subr.bf16.mxu0 0
      %378 = vmatpush1.bf16.msra.mxu0 0
      %379 = vmatprep.subr.bf16.mxu0 0
      %380 = vmatpush1.bf16.msra.mxu0 0
      %381 = vmatprep.subr.bf16.mxu0 0
      %382 = vmatpush1.bf16.msra.mxu0 0
      %383 = vmatprep.subr.bf16.mxu0 0
      %384 = vmatpush1.bf16.msra.mxu0 0
      %385 = vmatprep.subr.bf16.mxu0 0
      %386 = vmatpush1.bf16.msra.mxu0 0
      %387 = vmatprep.subr.bf16.mxu0 0
      %388 = vmatpush1.bf16.msra.mxu0 0
      %389 = vmatprep.subr.bf16.mxu0 0
      %390 = vmatpush1.bf16.msra.mxu0 0
      %391 = vmatprep.subr.bf16.mxu0 0
      %392 = vmatpush1.bf16.msra.mxu0 0
      %393 = vmatprep.subr.bf16.mxu0 0
      %394 = vmatpush1.bf16.msra.mxu0 0
      %395 = vmatprep.mubr.bf16.mxu0 0
      %396 = vmatmul.mubr.bf16.gmra.mrb[0].mxu0 %v340
      %v397 = vpop.f32.mrb[0].mxu0
      %v398 = vadd.f32 0.0, %v397
      %v399 = vpop.f32.mrb[0].mxu0
      %v400 = vpop.f32.mrb[0].mxu0
      %v401 = vadd.f32 0.0, %v400
      %v402 = vpop.f32.mrb[0].mxu0
      %403 = vmatprep.mubr.bf16.mxu0 0
      %404 = vmatmul.mubr.bf16.gmra.mrb[0].mxu0 %v343
      %v405 = vpop.f32.mrb[0].mxu0
      %v406 = vadd.f32 0.0, %v405
      %v407 = vpop.f32.mrb[0].mxu0
      %v408 = vpop.f32.mrb[0].mxu0
      %v409 = vadd.f32 0.0, %v408
      %v410 = vpop.f32.mrb[0].mxu0
      %411 = vmatprep.mubr.bf16.mxu0 0
      %412 = vmatmul.mubr.bf16.gmra.mrb[0].mxu0 %v346
      %v413 = vpop.f32.mrb[0].mxu0
      %v414 = vadd.f32 0.0, %v413
      %v415 = vpop.f32.mrb[0].mxu0
      %v416 = vpop.f32.mrb[0].mxu0
      %v417 = vadd.f32 0.0, %v416
      %v418 = vpop.f32.mrb[0].mxu0
      %419 = vmatprep.mubr.bf16.mxu0 0
      %420 = vmatmul.mubr.bf16.gmra.mrb[0].mxu0 %v349
      %v421 = vpop.f32.mrb[0].mxu0
      %v422 = vadd.f32 0.0, %v421
      %v423 = vpop.f32.mrb[0].mxu0
      %v424 = vpop.f32.mrb[0].mxu0
      %v425 = vadd.f32 0.0, %v424
      %v426 = vpop.f32.mrb[0].mxu0
      %427 = vmatprep.mubr.bf16.mxu0 0
      %428 = vmatmul.mubr.bf16.gmra.mrb[0].mxu0 %v352
      %v429 = vpop.f32.mrb[0].mxu0
      %v430 = vadd.f32 0.0, %v429
      %v431 = vpop.f32.mrb[0].mxu0
      %v432 = vpop.f32.mrb[0].mxu0
      %v433 = vadd.f32 0.0, %v432
      %v434 = vpop.f32.mrb[0].mxu0
      %435 = vmatprep.mubr.bf16.mxu0 0
      %436 = vmatmul.mubr.bf16.gmra.mrb[0].mxu0 %v355
      %v437 = vpop.f32.mrb[0].mxu0
      %v438 = vadd.f32 0.0, %v437
      %v439 = vpop.f32.mrb[0].mxu0
      %v440 = vpop.f32.mrb[0].mxu0
      %v441 = vadd.f32 0.0, %v440
      %v442 = vpop.f32.mrb[0].mxu0
      %443 = vmatprep.mubr.bf16.mxu0 0
      %444 = vmatmul.mubr.bf16.gmra.mrb[0].mxu0 %v358
      %v445 = vpop.f32.mrb[0].mxu0
      %v446 = vadd.f32 0.0, %v445
      %v447 = vpop.f32.mrb[0].mxu0
      %v448 = vpop.f32.mrb[0].mxu0
      %v449 = vadd.f32 0.0, %v448
      %v450 = vpop.f32.mrb[0].mxu0
      %451 = vmatprep.mubr.bf16.mxu0 0
      %452 = vmatmul.mubr.bf16.gmra.mrb[0].mxu0 %v361
      %v453 = vpop.f32.mrb[0].mxu0
      %v454 = vadd.f32 0.0, %v453
      %v455 = vpop.f32.mrb[0].mxu0
      %v456 = vpop.f32.mrb[0].mxu0
      %v457 = vadd.f32 0.0, %v456
      %v458 = vpop.f32.mrb[0].mxu0
      %459 = vdwg.mxu0
      %v460 = vpack.c.bf16 %v401, %v398
      %v461 = vpack.c.bf16 %v409, %v406
      %v462 = vpack.c.bf16 %v417, %v414
      %v463 = vpack.c.bf16 %v425, %v422
      %v464 = vpack.c.bf16 %v433, %v430
      %v465 = vpack.c.bf16 %v441, %v438
      %v466 = vpack.c.bf16 %v449, %v446
      %v467 = vpack.c.bf16 %v457, %v454
      %v476 = vunpack.c.l.b16 %v460
      %v477 = vunpack.c.h.b16 %v460
      %v478 = vunpack.c.l.b16 %v461
      %v479 = vunpack.c.h.b16 %v461
      %v480 = vunpack.c.l.b16 %v462
      %v481 = vunpack.c.h.b16 %v462
      %v482 = vunpack.c.l.b16 %v463
      %v483 = vunpack.c.h.b16 %v463
      %v484 = vunpack.c.l.b16 %v464
      %v485 = vunpack.c.h.b16 %v464
      %v486 = vunpack.c.l.b16 %v465
      %v487 = vunpack.c.h.b16 %v465
      %v488 = vunpack.c.l.b16 %v466
      %v489 = vunpack.c.h.b16 %v466
      %v490 = vunpack.c.l.b16 %v467
      %v491 = vunpack.c.h.b16 %v467
      %v492 = vpack.c.b16 %v476, %v476
      %v493 = vpack.c.b16 %v477, %v477
      %v494 = vpack.c.b16 %v478, %v478
      %v495 = vpack.c.b16 %v479, %v479
      %v496 = vpack.c.b16 %v480, %v480
      %v497 = vpack.c.b16 %v481, %v481
      %v498 = vpack.c.b16 %v482, %v482
      %v499 = vpack.c.b16 %v483, %v483
      %v500 = vpack.c.b16 %v484, %v484
      %v501 = vpack.c.b16 %v485, %v485
      %v502 = vpack.c.b16 %v486, %v486
      %v503 = vpack.c.b16 %v487, %v487
      %v504 = vpack.c.b16 %v488, %v488
      %v505 = vpack.c.b16 %v489, %v489
      %v506 = vpack.c.b16 %v490, %v490
      %v507 = vpack.c.b16 %v491, %v491
      %vm524 = vcmask 60416
      %525 = vst.msk [vmem:[%s240] sm:$0xf] %vm524, %v492
      %526 = vst.msk [vmem:[%s240 + $0x4] sm:$0xf] %vm524, %v493
      %527 = vst.msk [vmem:[%s240 + $0x8] sm:$0xf] %vm524, %v494
      %528 = vst.msk [vmem:[%s240 + $0xc] sm:$0xf] %vm524, %v495
      %529 = vst.msk [vmem:[%s240 + $0x10] sm:$0xf] %vm524, %v496
      %530 = vst.msk [vmem:[%s240 + $0x14] sm:$0xf] %vm524, %v497
      %531 = vst.msk [vmem:[%s240 + $0x18] sm:$0xf] %vm524, %v498
      %532 = vst.msk [vmem:[%s240 + $0x1c] sm:$0xf] %vm524, %v499
      %533 = vst.msk [vmem:[%s240 + $0x20] sm:$0xf] %vm524, %v500
      %534 = vst.msk [vmem:[%s240 + $0x24] sm:$0xf] %vm524, %v501
      %535 = vst.msk [vmem:[%s240 + $0x28] sm:$0xf] %vm524, %v502
      %536 = vst.msk [vmem:[%s240 + $0x2c] sm:$0xf] %vm524, %v503
      %537 = vst.msk [vmem:[%s240 + $0x30] sm:$0xf] %vm524, %v504
      %538 = vst.msk [vmem:[%s240 + $0x34] sm:$0xf] %vm524, %v505
      %539 = vst.msk [vmem:[%s240 + $0x38] sm:$0xf] %vm524, %v506
      %540 = vst.msk [vmem:[%s240 + $0x3c] sm:$0xf] %vm524, %v507
      %vm541 = vcmask 64512
      %v542 = vsel %vm541, %v398, 0.0
      %v543 = vsel %vm541, %v401, 0.0
      %v544 = vadd.f32 %v542, %v543
      %v545 = vsel %vm541, %v406, 0.0
      %v546 = vadd.f32 %v544, %v545
      %v547 = vsel %vm541, %v409, 0.0
      %v548 = vadd.f32 %v546, %v547
      %v549 = vsel %vm541, %v414, 0.0
      %v550 = vadd.f32 %v548, %v549
      %v551 = vsel %vm541, %v417, 0.0
      %v552 = vadd.f32 %v550, %v551
      %v553 = vsel %vm541, %v422, 0.0
      %v554 = vadd.f32 %v552, %v553
      %v555 = vsel %vm541, %v425, 0.0
      %v556 = vadd.f32 %v554, %v555
      %v557 = vsel %vm541, %v430, 0.0
      %v558 = vadd.f32 %v556, %v557
      %v559 = vsel %vm541, %v433, 0.0
      %v560 = vadd.f32 %v558, %v559
      %v561 = vsel %vm541, %v438, 0.0
      %v562 = vadd.f32 %v560, %v561
      %v563 = vsel %vm541, %v441, 0.0
      %v564 = vadd.f32 %v562, %v563
      %v565 = vsel %vm541, %v446, 0.0
      %v566 = vadd.f32 %v564, %v565
      %v567 = vsel %vm541, %v449, 0.0
      %v568 = vadd.f32 %v566, %v567
      %v569 = vsel %vm541, %v454, 0.0
      %v570 = vadd.f32 %v568, %v569
      %v571 = vsel %vm541, %v457, 0.0
      %v572 = vadd.f32 %v570, %v571
      %v573 = vrot.slane %v572, 4
      %v574 = vadd.f32 %v572, %v573
      %v575 = vrot.slane %v574, 2
      %v576 = vadd.f32 %v574, %v575
      %v577 = vrot.slane %v576, 1
      %v578 = vadd.f32 %v576, %v577
      %v579 = vmul.f32 %v398, %v398
      %v580 = vmul.f32 %v401, %v401
      %v581 = vmul.f32 %v406, %v406
      %v582 = vmul.f32 %v409, %v409
      %v583 = vmul.f32 %v414, %v414
      %v584 = vmul.f32 %v417, %v417
      %v585 = vmul.f32 %v422, %v422
      %v586 = vmul.f32 %v425, %v425
      %v587 = vmul.f32 %v430, %v430
      %v588 = vmul.f32 %v433, %v433
      %v589 = vmul.f32 %v438, %v438
      %v590 = vmul.f32 %v441, %v441
      %v591 = vmul.f32 %v446, %v446
      %v592 = vmul.f32 %v449, %v449
      %v593 = vmul.f32 %v454, %v454
      %v594 = vmul.f32 %v457, %v457
      %v595 = vsel %vm541, %v579, 0.0
      %v596 = vsel %vm541, %v580, 0.0
      %v597 = vadd.f32 %v595, %v596
      %v598 = vsel %vm541, %v581, 0.0
      %v599 = vadd.f32 %v597, %v598
      %v600 = vsel %vm541, %v582, 0.0
      %v601 = vadd.f32 %v599, %v600
      %v602 = vsel %vm541, %v583, 0.0
      %v603 = vadd.f32 %v601, %v602
      %v604 = vsel %vm541, %v584, 0.0
      %v605 = vadd.f32 %v603, %v604
      %v606 = vsel %vm541, %v585, 0.0
      %v607 = vadd.f32 %v605, %v606
      %v608 = vsel %vm541, %v586, 0.0
      %v609 = vadd.f32 %v607, %v608
      %v610 = vsel %vm541, %v587, 0.0
      %v611 = vadd.f32 %v609, %v610
      %v612 = vsel %vm541, %v588, 0.0
      %v613 = vadd.f32 %v611, %v612
      %v614 = vsel %vm541, %v589, 0.0
      %v615 = vadd.f32 %v613, %v614
      %v616 = vsel %vm541, %v590, 0.0
      %v617 = vadd.f32 %v615, %v616
      %v618 = vsel %vm541, %v591, 0.0
      %v619 = vadd.f32 %v617, %v618
      %v620 = vsel %vm541, %v592, 0.0
      %v621 = vadd.f32 %v619, %v620
      %v622 = vsel %vm541, %v593, 0.0
      %v623 = vadd.f32 %v621, %v622
      %v624 = vsel %vm541, %v594, 0.0
      %v625 = vadd.f32 %v623, %v624
      %v626 = vrot.slane %v625, 4
      %v627 = vadd.f32 %v625, %v626
      %v628 = vrot.slane %v627, 2
      %v629 = vadd.f32 %v627, %v628
      %v630 = vrot.slane %v629, 1
      %v631 = vadd.f32 %v629, %v630
      %vm632 = vcmask 1040384
      %v633 = vsel %vm632, %v578, %v631
      %vm634 = vcmask 58368
      %635 = vst.msk [vmem:[%s248] sm:$0x3] %vm634, %v633
      %s636 = smul.u32 16, %s20
      %p637 = scmp.lt.s32.totalorder %s19, 3
      %s638 = scalar_select %p637, %s19, 3
      %p639 = scmp.lt.s32.totalorder %s636, 15
      %s640 = scalar_select %p639, %s636, 15
      %s641 = smul.addr %s638, 16
      %s642 = sadd.s32 %s640, %s641
      %s643 = smul.addr %s642, 4
      %s644 = scalar_lea.vmem %s2, %s643
      %p645 = scmp.lt.s32.totalorder %s19, 3
      %s646 = scalar_select %p645, %s19, 3
      %p647 = scmp.lt.s32.totalorder %s20, 0
      %s648 = scalar_select %p647, %s20, 0
      %s649 = sadd.s32 %s648, %s646
      %s650 = smul.addr %s649, 2
      %s651 = scalar_lea.vmem %s3, %s650
      // Predicated region
      $region29: #{_lambda_.6} parent=27 // pred_check
        %p652 = pneg %p101
      $region30: #{_lambda_.6} parent=27 // pred_check_branch
        %654 = sbr.rel (%p652) target = $region32
      $region31: #{_lambda_.6} parent=27 // pred_region
        %s655 = smul.u32 16, %s20
      $region32: #{_lambda_.6} parent=27 // pred_fallthru
        _
      // Predicated region
      $region33: #{_lambda_.6} parent=27 // pred_check
        %p656 = pneg %p129
      $region34: #{_lambda_.6} parent=27 // pred_check_branch
        %658 = sbr.rel (%p656) target = $region36
      $region35: #{_lambda_.6} parent=27 // pred_region
        _
      $region36: #{_lambda_.6} parent=27 // pred_fallthru
        _
    $region28: #{_lambda_.6} parent=5 // pred_fallthru
      _
    %p659 = scmp.le.s32.totalorder 2, %s10
    // Predicated region
    $region37: #{_lambda_.6} parent=5 // pred_check
      %p660 = pneg %p659
    $region38: #{_lambda_.6} parent=5 // pred_check_branch
      %662 = sbr.rel (%p660) target = $region40
    $region39: #{_lambda_.6} parent=5 // pred_region
      %s663 = ssub.s32 %s10, 2
      // Predicated region
      $region41: #{_lambda_.6} parent=39 // pred_check
        %p664 = pneg %p107
      $region42: #{_lambda_.6} parent=39 // pred_check_branch
        %666 = sbr.rel (%p664) target = $region44
      $region43: #{_lambda_.6} parent=39 // pred_region
        %s667 = smul.u32 16, %s22
        %p668 = scmp.lt.s32.totalorder %s21, 3
        %s669 = scalar_select %p668, %s21, 3
        %p670 = scmp.lt.s32.totalorder %s667, 15
        %s671 = scalar_select %p670, %s667, 15
        %s672 = smul.addr %s669, 16
        %s673 = sadd.s32 %s671, %s672
        %s674 = smul.addr %s673, 4
        %s675 = scalar_lea.vmem %s2, %s674
      $region44: #{_lambda_.6} parent=39 // pred_fallthru
        _
      // Predicated region
      $region45: #{_lambda_.6} parent=39 // pred_check
        %p676 = pneg %p135
      $region46: #{_lambda_.6} parent=39 // pred_check_branch
        %678 = sbr.rel (%p676) target = $region48
      $region47: #{_lambda_.6} parent=39 // pred_region
        %p679 = scmp.lt.s32.totalorder %s21, 3
        %s680 = scalar_select %p679, %s21, 3
        %p681 = scmp.lt.s32.totalorder %s22, 0
        %s682 = scalar_select %p681, %s22, 0
        %s683 = sadd.s32 %s682, %s680
        %s684 = smul.addr %s683, 2
        %s685 = scalar_lea.vmem %s3, %s684
      $region48: #{_lambda_.6} parent=39 // pred_fallthru
        _
    $region40: #{_lambda_.6} parent=5 // pred_fallthru
      _
  $region6: #{_lambda_.6} parent=0 // loop_footer
    %s14 = sadd.s32 1, %s10
  $region7: #{_lambda_.6} parent=0 // loop_footer_branch
    %9 = sbr.rel target = $region3
  $region8: #{_lambda_.6} parent=0 // loop_exit
    _

// kernel: _lambda_.7
$region0: #{_lambda_.7}
  #allocation0 [shape = 'u32[]', space=smem, size = 0x4, offset = 0x4, fixed_abs, tag = 'smem constant byte address 0x4 - core index']
  #allocation1 [shape = 'u32[144,128]{1,0:T(1,128)}', space=vmem, size = 0x12000, scoped, tag = 'internal scratch']
  %s0 = inlined_call_operand.vmem [shape: bf16[4,512,32], index: 0, kind: input, shape index: {}]
  %s1 = inlined_call_operand.vmem [shape: bf16[4,32,3], index: 1, kind: input, shape index: {}]
  %s2 = inlined_call_operand.vmem [shape: f32[4,512,3], index: 2, kind: output, shape index: {}]
  %s3 = sld [smem:[#allocation0]]
  $region41: #{_lambda_.7} parent=0
    _
  %s5 = ssub.s32 1, %s3
  %s6 = scalar_select 0, %s5, %s3
  loop: start=0, step=1, limit=6
  $region2: #{_lambda_.7} parent=0 // loop_pre_header
    _
  $region3: #{_lambda_.7} parent=0 // loop_header
    %s8 = sphi 0, %s12
    %p9 = scmp.ge.s32.totalorder %s8, 6
    %s15 = sphi 0, %s27
    %s16 = sphi 0, %s23
    %s17 = sphi 0, %s15
    %s18 = sphi 0, %s16
    %s19 = sphi 0, %s17
    %s20 = sphi 0, %s18
    %s32 = sphi 0, %s34
    %s35 = sphi 0, %s32
    %s36 = sphi 0, %s35
    %s52 = sphi 0, %s36
    %s58 = sphi 0, %s60
    %s61 = sphi 0, %s58
    %s62 = sphi 0, %s61
    %s78 = sphi 0, %s62
    %s86 = sphi 0, %s88
    %s89 = sphi 0, %s86
    %s90 = sphi 0, %s89
    %s106 = sphi 0, %s90
  $region4: #{_lambda_.7} parent=0 // loop_header_branch
    %11 = sbr.rel (%p9) target = $region8
  $region5: #{_lambda_.7} parent=0 // loop_body
    %s13 = ssub.s32 %s8, 1
    %s14 = ssub.s32 %s8, 2
    %s21 = sadd.s32 1, %s16
    %p22 = scmp.ge.s32.totalorder %s21, 1
    %s23 = scalar_select %p22, 0, %s21
    %s24 = sadd.s32 1, %s15
    %s25 = scalar_select %p22, %s24, %s15
    %p26 = scmp.ge.s32.totalorder %s25, 4
    %s27 = scalar_select %p26, 0, %s25
    %s28 = ssub.s32 %s15, %s27
    %s29 = ssub.s32 %s16, %s23
    %s30 = sor.u32 %s28, %s29
    %p31 = scmp.eq.s32.totalorder %s30, 0
    %s33 = sadd.s32 %s32, 1
    %s34 = scalar_select %p31, %s32, %s33
    %p37 = pneg %p31
    %p38 = scmp.eq.s32.totalorder %s8, 3
    %p39 = por %p37, %p38
    %p40 = scmp.ne.s32.totalorder %s32, %s35
    %p41 = scmp.eq.s32.totalorder %s8, 0
    %p42 = por %p40, %p41
    %p43 = scmp.ne.s32.totalorder %s32, %s35
    %p44 = scmp.eq.s32.totalorder %s13, 3
    %p45 = por %p43, %p44
    %p46 = scmp.ne.s32.totalorder %s35, %s36
    %p47 = scmp.eq.s32.totalorder %s13, 0
    %p48 = por %p46, %p47
    %p49 = scmp.ne.s32.totalorder %s35, %s36
    %p50 = scmp.eq.s32.totalorder %s14, 3
    %p51 = por %p49, %p50
    %p53 = scmp.ne.s32.totalorder %s36, %s52
    %p54 = scmp.eq.s32.totalorder %s14, 0
    %p55 = por %p53, %p54
    %s56 = ssub.s32 %s15, %s27
    %p57 = scmp.eq.s32.totalorder %s56, 0
    %s59 = sadd.s32 %s58, 1
    %s60 = scalar_select %p57, %s58, %s59
    %p63 = pneg %p57
    %p64 = scmp.eq.s32.totalorder %s8, 3
    %p65 = por %p63, %p64
    %p66 = scmp.ne.s32.totalorder %s58, %s61
    %p67 = scmp.eq.s32.totalorder %s8, 0
    %p68 = por %p66, %p67
    %p69 = scmp.ne.s32.totalorder %s58, %s61
    %p70 = scmp.eq.s32.totalorder %s13, 3
    %p71 = por %p69, %p70
    %p72 = scmp.ne.s32.totalorder %s61, %s62
    %p73 = scmp.eq.s32.totalorder %s13, 0
    %p74 = por %p72, %p73
    %p75 = scmp.ne.s32.totalorder %s61, %s62
    %p76 = scmp.eq.s32.totalorder %s14, 3
    %p77 = por %p75, %p76
    %p79 = scmp.ne.s32.totalorder %s62, %s78
    %p80 = scmp.eq.s32.totalorder %s14, 0
    %p81 = por %p79, %p80
    %s82 = ssub.s32 %s15, %s27
    %s83 = ssub.s32 %s16, %s23
    %s84 = sor.u32 %s82, %s83
    %p85 = scmp.eq.s32.totalorder %s84, 0
    %s87 = sadd.s32 %s86, 1
    %s88 = scalar_select %p85, %s86, %s87
    %p91 = pneg %p85
    %p92 = scmp.eq.s32.totalorder %s8, 3
    %p93 = por %p91, %p92
    %p94 = scmp.ne.s32.totalorder %s86, %s89
    %p95 = scmp.eq.s32.totalorder %s8, 0
    %p96 = por %p94, %p95
    %p97 = scmp.ne.s32.totalorder %s86, %s89
    %p98 = scmp.eq.s32.totalorder %s13, 3
    %p99 = por %p97, %p98
    %p100 = scmp.ne.s32.totalorder %s89, %s90
    %p101 = scmp.eq.s32.totalorder %s13, 0
    %p102 = por %p100, %p101
    %p103 = scmp.ne.s32.totalorder %s89, %s90
    %p104 = scmp.eq.s32.totalorder %s14, 3
    %p105 = por %p103, %p104
    %p107 = scmp.ne.s32.totalorder %s90, %s106
    %p108 = scmp.eq.s32.totalorder %s14, 0
    %p109 = por %p107, %p108
    %p110 = scmp.le.s32.totalorder 1, %s8
    %p111 = scmp.lt.s32.totalorder %s8, 5
    %p112 = pnand %p110, %p111
    %p113 = pneg %p112
    // Predicated region
    $region9: #{_lambda_.7} parent=5 // pred_check
      _
    $region10: #{_lambda_.7} parent=5 // pred_check_branch
      %115 = sbr.rel (%p112) target = $region12
    $region11: #{_lambda_.7} parent=5 // pred_region
      %s116 = ssub.s32 %s8, 1
    $region12: #{_lambda_.7} parent=5 // pred_fallthru
      _
    %p117 = scmp.lt.s32.totalorder %s8, 4
    // Predicated region
    $region13: #{_lambda_.7} parent=5 // pred_check
      %p118 = pneg %p117
    $region14: #{_lambda_.7} parent=5 // pred_check_branch
      %120 = sbr.rel (%p118) target = $region16
    $region15: #{_lambda_.7} parent=5 // pred_region
      // Predicated region
      $region17: #{_lambda_.7} parent=15 // pred_check
        %p121 = pneg %p42
      $region18: #{_lambda_.7} parent=15 // pred_check_branch
        %123 = sbr.rel (%p121) target = $region20
      $region19: #{_lambda_.7} parent=15 // pred_region
        %s124 = smul.u32 64, %s16
        %p125 = scmp.lt.s32.totalorder %s15, 3
        %s126 = scalar_select %p125, %s15, 3
        %p127 = scmp.lt.s32.totalorder %s124, 63
        %s128 = scalar_select %p127, %s124, 63
        %s129 = smul.addr %s126, 64
        %s130 = sadd.s32 %s128, %s129
        %s131 = smul.addr %s130, 4
        %s132 = scalar_lea.vmem %s0, %s131
        %s133 = smul.u32 64, %s16
      $region20: #{_lambda_.7} parent=15 // pred_fallthru
        _
      // Predicated region
      $region21: #{_lambda_.7} parent=15 // pred_check
        %p134 = pneg %p68
      $region22: #{_lambda_.7} parent=15 // pred_check_branch
        %136 = sbr.rel (%p134) target = $region24
      $region23: #{_lambda_.7} parent=15 // pred_region
        %p137 = scmp.lt.s32.totalorder %s15, 3
        %s138 = scalar_select %p137, %s15, 3
        %s139 = smul.addr %s138, 4
        %s140 = smul.addr %s139, 4
        %s141 = scalar_lea.vmem %s1, %s140
      $region24: #{_lambda_.7} parent=15 // pred_fallthru
        _
    $region16: #{_lambda_.7} parent=5 // pred_fallthru
      _
    %p142 = scmp.le.s32.totalorder 1, %s8
    %p143 = scmp.lt.s32.totalorder %s8, 5
    %p144 = pnand %p142, %p143
    %p145 = pneg %p144
    // Predicated region
    $region25: #{_lambda_.7} parent=5 // pred_check
      _
    $region26: #{_lambda_.7} parent=5 // pred_check_branch
      %147 = sbr.rel (%p144) target = $region28
    $region27: #{_lambda_.7} parent=5 // pred_region
      %s148 = ssub.s32 %s8, 1
      %s149 = smul.u32 64, %s18
      %p150 = scmp.lt.s32.totalorder %s17, 3
      %s151 = scalar_select %p150, %s17, 3
      %p152 = scmp.lt.s32.totalorder %s149, 63
      %s153 = scalar_select %p152, %s149, 63
      %s154 = smul.addr %s151, 64
      %s155 = sadd.s32 %s153, %s154
      %s156 = smul.addr %s155, 4
      %s157 = scalar_lea.vmem %s0, %s156
      %p158 = pneg %p48
      %p159 = pneg %p45
      %p160 = scmp.lt.s32.totalorder %s17, 3
      %s161 = scalar_select %p160, %s17, 3
      %s162 = smul.addr %s161, 4
      %s163 = smul.addr %s162, 4
      %s164 = scalar_lea.vmem %s1, %s163
      %p165 = pneg %p74
      %p166 = pneg %p71
      %p167 = pneg %p102
      %p168 = pneg %p99
      %s169 = smul.u32 64, %s18
      %p170 = scmp.lt.s32.totalorder %s17, 3
      %s171 = scalar_select %p170, %s17, 3
      %p172 = scmp.lt.s32.totalorder %s169, 63
      %s173 = scalar_select %p172, %s169, 63
      %s174 = smul.addr %s171, 64
      %s175 = sadd.s32 %s173, %s174
      %s176 = smul.addr %s175, 8
      %s177 = scalar_lea.vmem %s2, %s176
      %s178 = smul.u32 64, %s18
      %p179 = scmp.lt.s32.totalorder %s17, 3
      %s180 = scalar_select %p179, %s17, 3
      %p181 = scmp.lt.s32.totalorder %s178, 63
      %s182 = scalar_select %p181, %s178, 63
      %s183 = smul.addr %s180, 64
      %s184 = sadd.s32 %s182, %s183
      %s185 = smul.addr %s184, 4
      %s186 = scalar_lea.vmem %s0, %s185
      %s187 = smul.u32 64, %s18
      %p188 = scmp.lt.s32.totalorder %s17, 3
      %s189 = scalar_select %p188, %s17, 3
      %s190 = smul.addr %s189, 4
      %s191 = smul.addr %s190, 4
      %s192 = scalar_lea.vmem %s1, %s191
      %s193 = smul.u32 64, %s18
      %p194 = scmp.lt.s32.totalorder %s17, 3
      %s195 = scalar_select %p194, %s17, 3
      %p196 = scmp.lt.s32.totalorder %s193, 63
      %s197 = scalar_select %p196, %s193, 63
      %s198 = smul.addr %s195, 64
      %s199 = sadd.s32 %s197, %s198
      %s200 = smul.addr %s199, 8
      %s201 = scalar_lea.vmem %s2, %s200
      %s202 = smul.u32 64, %s18
      %v204 = vld [vmem:[%s186] sm:$0xf]
      %v205 = vld [vmem:[%s186 + $0x4] sm:$0xf]
      %v206 = vld [vmem:[%s186 + $0x8] sm:$0xf]
      %v207 = vld [vmem:[%s186 + $0xc] sm:$0xf]
      %v208 = vld [vmem:[%s186 + $0x10] sm:$0xf]
      %v209 = vld [vmem:[%s186 + $0x14] sm:$0xf]
      %v210 = vld [vmem:[%s186 + $0x18] sm:$0xf]
      %v211 = vld [vmem:[%s186 + $0x1c] sm:$0xf]
      %v212 = vld [vmem:[%s186 + $0x20] sm:$0xf]
      %v213 = vld [vmem:[%s186 + $0x24] sm:$0xf]
      %v214 = vld [vmem:[%s186 + $0x28] sm:$0xf]
      %v215 = vld [vmem:[%s186 + $0x2c] sm:$0xf]
      %v216 = vld [vmem:[%s186 + $0x30] sm:$0xf]
      %v217 = vld [vmem:[%s186 + $0x34] sm:$0xf]
      %v218 = vld [vmem:[%s186 + $0x38] sm:$0xf]
      %v219 = vld [vmem:[%s186 + $0x3c] sm:$0xf]
      %v220 = vld [vmem:[%s186 + $0x40] sm:$0xf]
      %v221 = vld [vmem:[%s186 + $0x44] sm:$0xf]
      %v222 = vld [vmem:[%s186 + $0x48] sm:$0xf]
      %v223 = vld [vmem:[%s186 + $0x4c] sm:$0xf]
      %v224 = vld [vmem:[%s186 + $0x50] sm:$0xf]
      %v225 = vld [vmem:[%s186 + $0x54] sm:$0xf]
      %v226 = vld [vmem:[%s186 + $0x58] sm:$0xf]
      %v227 = vld [vmem:[%s186 + $0x5c] sm:$0xf]
      %v228 = vld [vmem:[%s186 + $0x60] sm:$0xf]
      %v229 = vld [vmem:[%s186 + $0x64] sm:$0xf]
      %v230 = vld [vmem:[%s186 + $0x68] sm:$0xf]
      %v231 = vld [vmem:[%s186 + $0x6c] sm:$0xf]
      %v232 = vld [vmem:[%s186 + $0x70] sm:$0xf]
      %v233 = vld [vmem:[%s186 + $0x74] sm:$0xf]
      %v234 = vld [vmem:[%s186 + $0x78] sm:$0xf]
      %v235 = vld [vmem:[%s186 + $0x7c] sm:$0xf]
      %v236 = vld [vmem:[%s186 + $0x80] sm:$0xf]
      %v237 = vld [vmem:[%s186 + $0x84] sm:$0xf]
      %v238 = vld [vmem:[%s186 + $0x88] sm:$0xf]
      %v239 = vld [vmem:[%s186 + $0x8c] sm:$0xf]
      %v240 = vld [vmem:[%s186 + $0x90] sm:$0xf]
      %v241 = vld [vmem:[%s186 + $0x94] sm:$0xf]
      %v242 = vld [vmem:[%s186 + $0x98] sm:$0xf]
      %v243 = vld [vmem:[%s186 + $0x9c] sm:$0xf]
      %v244 = vld [vmem:[%s186 + $0xa0] sm:$0xf]
      %v245 = vld [vmem:[%s186 + $0xa4] sm:$0xf]
      %v246 = vld [vmem:[%s186 + $0xa8] sm:$0xf]
      %v247 = vld [vmem:[%s186 + $0xac] sm:$0xf]
      %v248 = vld [vmem:[%s186 + $0xb0] sm:$0xf]
      %v249 = vld [vmem:[%s186 + $0xb4] sm:$0xf]
      %v250 = vld [vmem:[%s186 + $0xb8] sm:$0xf]
      %v251 = vld [vmem:[%s186 + $0xbc] sm:$0xf]
      %v252 = vld [vmem:[%s186 + $0xc0] sm:$0xf]
      %v253 = vld [vmem:[%s186 + $0xc4] sm:$0xf]
      %v254 = vld [vmem:[%s186 + $0xc8] sm:$0xf]
      %v255 = vld [vmem:[%s186 + $0xcc] sm:$0xf]
      %v256 = vld [vmem:[%s186 + $0xd0] sm:$0xf]
      %v257 = vld [vmem:[%s186 + $0xd4] sm:$0xf]
      %v258 = vld [vmem:[%s186 + $0xd8] sm:$0xf]
      %v259 = vld [vmem:[%s186 + $0xdc] sm:$0xf]
      %v260 = vld [vmem:[%s186 + $0xe0] sm:$0xf]
      %v261 = vld [vmem:[%s186 + $0xe4] sm:$0xf]
      %v262 = vld [vmem:[%s186 + $0xe8] sm:$0xf]
      %v263 = vld [vmem:[%s186 + $0xec] sm:$0xf]
      %v264 = vld [vmem:[%s186 + $0xf0] sm:$0xf]
      %v265 = vld [vmem:[%s186 + $0xf4] sm:$0xf]
      %v266 = vld [vmem:[%s186 + $0xf8] sm:$0xf]
      %v267 = vld [vmem:[%s186 + $0xfc] sm:$0xf]
      %v268 = vld [vmem:[%s192] sm:$0xf]
      %v269 = vld [vmem:[%s192 + $0x4] sm:$0xf]
      %v270 = vld [vmem:[%s192 + $0x8] sm:$0xf]
      %v271 = vld [vmem:[%s192 + $0xc] sm:$0xf]
      %v336 = vunpack.c.l.b16 %v204
      %v337 = vunpack.c.l.b16 %v205
      %v338 = vunpack.c.l.b16 %v206
      %v339 = vunpack.c.l.b16 %v207
      %v340 = vunpack.c.l.b16 %v208
      %v341 = vunpack.c.l.b16 %v209
      %v342 = vunpack.c.l.b16 %v210
      %v343 = vunpack.c.l.b16 %v211
      %v344 = vunpack.c.l.b16 %v212
      %v345 = vunpack.c.l.b16 %v213
      %v346 = vunpack.c.l.b16 %v214
      %v347 = vunpack.c.l.b16 %v215
      %v348 = vunpack.c.l.b16 %v216
      %v349 = vunpack.c.l.b16 %v217
      %v350 = vunpack.c.l.b16 %v218
      %v351 = vunpack.c.l.b16 %v219
      %v352 = vunpack.c.l.b16 %v220
      %v353 = vunpack.c.l.b16 %v221
      %v354 = vunpack.c.l.b16 %v222
      %v355 = vunpack.c.l.b16 %v223
      %v356 = vunpack.c.l.b16 %v224
      %v357 = vunpack.c.l.b16 %v225
      %v358 = vunpack.c.l.b16 %v226
      %v359 = vunpack.c.l.b16 %v227
      %v360 = vunpack.c.l.b16 %v228
      %v361 = vunpack.c.l.b16 %v229
      %v362 = vunpack.c.l.b16 %v230
      %v363 = vunpack.c.l.b16 %v231
      %v364 = vunpack.c.l.b16 %v232
      %v365 = vunpack.c.l.b16 %v233
      %v366 = vunpack.c.l.b16 %v234
      %v367 = vunpack.c.l.b16 %v235
      %v368 = vunpack.c.l.b16 %v236
      %v369 = vunpack.c.l.b16 %v237
      %v370 = vunpack.c.l.b16 %v238
      %v371 = vunpack.c.l.b16 %v239
      %v372 = vunpack.c.l.b16 %v240
      %v373 = vunpack.c.l.b16 %v241
      %v374 = vunpack.c.l.b16 %v242
      %v375 = vunpack.c.l.b16 %v243
      %v376 = vunpack.c.l.b16 %v244
      %v377 = vunpack.c.l.b16 %v245
      %v378 = vunpack.c.l.b16 %v246
      %v379 = vunpack.c.l.b16 %v247
      %v380 = vunpack.c.l.b16 %v248
      %v381 = vunpack.c.l.b16 %v249
      %v382 = vunpack.c.l.b16 %v250
      %v383 = vunpack.c.l.b16 %v251
      %v384 = vunpack.c.l.b16 %v252
      %v385 = vunpack.c.l.b16 %v253
      %v386 = vunpack.c.l.b16 %v254
      %v387 = vunpack.c.l.b16 %v255
      %v388 = vunpack.c.l.b16 %v256
      %v389 = vunpack.c.l.b16 %v257
      %v390 = vunpack.c.l.b16 %v258
      %v391 = vunpack.c.l.b16 %v259
      %v392 = vunpack.c.l.b16 %v260
      %v393 = vunpack.c.l.b16 %v261
      %v394 = vunpack.c.l.b16 %v262
      %v395 = vunpack.c.l.b16 %v263
      %v396 = vunpack.c.l.b16 %v264
      %v397 = vunpack.c.l.b16 %v265
      %v398 = vunpack.c.l.b16 %v266
      %v399 = vunpack.c.l.b16 %v267
      %v400 = vpack.c.b16 %v337, %v336
      %v401 = vpack.c.b16 %v339, %v338
      %v402 = vpack.c.b16 %v341, %v340
      %v403 = vpack.c.b16 %v343, %v342
      %v404 = vpack.c.b16 %v345, %v344
      %v405 = vpack.c.b16 %v347, %v346
      %v406 = vpack.c.b16 %v349, %v348
      %v407 = vpack.c.b16 %v351, %v350
      %v408 = vpack.c.b16 %v353, %v352
      %v409 = vpack.c.b16 %v355, %v354
      %v410 = vpack.c.b16 %v357, %v356
      %v411 = vpack.c.b16 %v359, %v358
      %v412 = vpack.c.b16 %v361, %v360
      %v413 = vpack.c.b16 %v363, %v362
      %v414 = vpack.c.b16 %v365, %v364
      %v415 = vpack.c.b16 %v367, %v366
      %v416 = vpack.c.b16 %v369, %v368
      %v417 = vpack.c.b16 %v371, %v370
      %v418 = vpack.c.b16 %v373, %v372
      %v419 = vpack.c.b16 %v375, %v374
      %v420 = vpack.c.b16 %v377, %v376
      %v421 = vpack.c.b16 %v379, %v378
      %v422 = vpack.c.b16 %v381, %v380
      %v423 = vpack.c.b16 %v383, %v382
      %v424 = vpack.c.b16 %v385, %v384
      %v425 = vpack.c.b16 %v387, %v386
      %v426 = vpack.c.b16 %v389, %v388
      %v427 = vpack.c.b16 %v391, %v390
      %v428 = vpack.c.b16 %v393, %v392
      %v429 = vpack.c.b16 %v395, %v394
      %v430 = vpack.c.b16 %v397, %v396
      %v431 = vpack.c.b16 %v399, %v398
      %v436 = vunpack.c.l.b16 %v268
      %v437 = vunpack.c.l.b16 %v269
      %v438 = vunpack.c.l.b16 %v270
      %v439 = vunpack.c.l.b16 %v271
      %v440 = vpack.c.b16 %v437, %v436
      %v441 = vpack.c.b16 %v439, %v438
      %vm444 = vcmask 261120
      %v446 = vsel %vm444, %v400, 0
      %v449 = vsel %vm444, %v401, 0
      %v452 = vsel %vm444, %v402, 0
      %v455 = vsel %vm444, %v403, 0
      %v458 = vsel %vm444, %v404, 0
      %v461 = vsel %vm444, %v405, 0
      %v464 = vsel %vm444, %v406, 0
      %v467 = vsel %vm444, %v407, 0
      %v470 = vsel %vm444, %v408, 0
      %v473 = vsel %vm444, %v409, 0
      %v476 = vsel %vm444, %v410, 0
      %v479 = vsel %vm444, %v411, 0
      %v482 = vsel %vm444, %v412, 0
      %v485 = vsel %vm444, %v413, 0
      %v488 = vsel %vm444, %v414, 0
      %v491 = vsel %vm444, %v415, 0
      %v494 = vsel %vm444, %v416, 0
      %v497 = vsel %vm444, %v417, 0
      %v500 = vsel %vm444, %v418, 0
      %v503 = vsel %vm444, %v419, 0
      %v506 = vsel %vm444, %v420, 0
      %v509 = vsel %vm444, %v421, 0
      %v512 = vsel %vm444, %v422, 0
      %v515 = vsel %vm444, %v423, 0
      %v518 = vsel %vm444, %v424, 0
      %v521 = vsel %vm444, %v425, 0
      %v524 = vsel %vm444, %v426, 0
      %v527 = vsel %vm444, %v427, 0
      %v530 = vsel %vm444, %v428, 0
      %v533 = vsel %vm444, %v429, 0
      %v536 = vsel %vm444, %v430, 0
      %v539 = vsel %vm444, %v431, 0
      %541 = vmatprep.subr.bf16.mxu0 0
      %542 = vmatpush1.bf16.msra.mxu0 %v440
      %543 = vmatprep.subr.bf16.mxu0 0
      %544 = vmatpush1.bf16.msra.mxu0 %v441
      %545 = vmatprep.subr.bf16.mxu0 0
      %546 = vmatpush1.bf16.msra.mxu0 0
      %547 = vmatprep.subr.bf16.mxu0 0
      %548 = vmatpush1.bf16.msra.mxu0 0
      %549 = vmatprep.subr.bf16.mxu0 0
      %550 = vmatpush1.bf16.msra.mxu0 0
      %551 = vmatprep.subr.bf16.mxu0 0
      %552 = vmatpush1.bf16.msra.mxu0 0
      %553 = vmatprep.subr.bf16.mxu0 0
      %554 = vmatpush1.bf16.msra.mxu0 0
      %555 = vmatprep.subr.bf16.mxu0 0
      %556 = vmatpush1.bf16.msra.mxu0 0
      %557 = vmatprep.subr.bf16.mxu0 0
      %558 = vmatpush1.bf16.msra.mxu0 0
      %559 = vmatprep.subr.bf16.mxu0 0
      %560 = vmatpush1.bf16.msra.mxu0 0
      %561 = vmatprep.subr.bf16.mxu0 0
      %562 = vmatpush1.bf16.msra.mxu0 0
      %563 = vmatprep.subr.bf16.mxu0 0
      %564 = vmatpush1.bf16.msra.mxu0 0
      %565 = vmatprep.subr.bf16.mxu0 0
      %566 = vmatpush1.bf16.msra.mxu0 0
      %567 = vmatprep.subr.bf16.mxu0 0
      %568 = vmatpush1.bf16.msra.mxu0 0
      %569 = vmatprep.subr.bf16.mxu0 0
      %570 = vmatpush1.bf16.msra.mxu0 0
      %571 = vmatprep.subr.bf16.mxu0 0
      %572 = vmatpush1.bf16.msra.mxu0 0
      %573 = vmatprep.mubr.bf16.mxu0 0
      %574 = vmatmul.mubr.bf16.gmra.mrb[0].mxu0 %v446
      %v575 = vpop.f32.mrb[0].mxu0
      %v576 = vadd.f32 0.0, %v575
      %v577 = vpop.f32.mrb[0].mxu0
      %v578 = vpop.f32.mrb[0].mxu0
      %v579 = vadd.f32 0.0, %v578
      %v580 = vpop.f32.mrb[0].mxu0
      %581 = vmatprep.mubr.bf16.mxu0 0
      %582 = vmatmul.mubr.bf16.gmra.mrb[0].mxu0 %v449
      %v583 = vpop.f32.mrb[0].mxu0
      %v584 = vadd.f32 0.0, %v583
      %v585 = vpop.f32.mrb[0].mxu0
      %v586 = vpop.f32.mrb[0].mxu0
      %v587 = vadd.f32 0.0, %v586
      %v588 = vpop.f32.mrb[0].mxu0
      %589 = vmatprep.mubr.bf16.mxu0 0
      %590 = vmatmul.mubr.bf16.gmra.mrb[0].mxu0 %v452
      %v591 = vpop.f32.mrb[0].mxu0
      %v592 = vadd.f32 0.0, %v591
      %v593 = vpop.f32.mrb[0].mxu0
      %v594 = vpop.f32.mrb[0].mxu0
      %v595 = vadd.f32 0.0, %v594
      %v596 = vpop.f32.mrb[0].mxu0
      %597 = vmatprep.mubr.bf16.mxu0 0
      %598 = vmatmul.mubr.bf16.gmra.mrb[0].mxu0 %v455
      %v599 = vpop.f32.mrb[0].mxu0
      %v600 = vadd.f32 0.0, %v599
      %v601 = vpop.f32.mrb[0].mxu0
      %v602 = vpop.f32.mrb[0].mxu0
      %v603 = vadd.f32 0.0, %v602
      %v604 = vpop.f32.mrb[0].mxu0
      %605 = vmatprep.mubr.bf16.mxu0 0
      %606 = vmatmul.mubr.bf16.gmra.mrb[0].mxu0 %v458
      %v607 = vpop.f32.mrb[0].mxu0
      %v608 = vadd.f32 0.0, %v607
      %v609 = vpop.f32.mrb[0].mxu0
      %v610 = vpop.f32.mrb[0].mxu0
      %v611 = vadd.f32 0.0, %v610
      %v612 = vpop.f32.mrb[0].mxu0
      %613 = vmatprep.mubr.bf16.mxu0 0
      %614 = vmatmul.mubr.bf16.gmra.mrb[0].mxu0 %v461
      %v615 = vpop.f32.mrb[0].mxu0
      %v616 = vadd.f32 0.0, %v615
      %v617 = vpop.f32.mrb[0].mxu0
      %v618 = vpop.f32.mrb[0].mxu0
      %v619 = vadd.f32 0.0, %v618
      %v620 = vpop.f32.mrb[0].mxu0
      %621 = vmatprep.mubr.bf16.mxu0 0
      %622 = vmatmul.mubr.bf16.gmra.mrb[0].mxu0 %v464
      %v623 = vpop.f32.mrb[0].mxu0
      %v624 = vadd.f32 0.0, %v623
      %v625 = vpop.f32.mrb[0].mxu0
      %v626 = vpop.f32.mrb[0].mxu0
      %v627 = vadd.f32 0.0, %v626
      %v628 = vpop.f32.mrb[0].mxu0
      %629 = vmatprep.mubr.bf16.mxu0 0
      %630 = vmatmul.mubr.bf16.gmra.mrb[0].mxu0 %v467
      %v631 = vpop.f32.mrb[0].mxu0
      %v632 = vadd.f32 0.0, %v631
      %v633 = vpop.f32.mrb[0].mxu0
      %v634 = vpop.f32.mrb[0].mxu0
      %v635 = vadd.f32 0.0, %v634
      %v636 = vpop.f32.mrb[0].mxu0
      %637 = vmatprep.mubr.bf16.mxu0 0
      %638 = vmatmul.mubr.bf16.gmra.mrb[0].mxu0 %v470
      %v639 = vpop.f32.mrb[0].mxu0
      %v640 = vadd.f32 0.0, %v639
      %v641 = vpop.f32.mrb[0].mxu0
      %v642 = vpop.f32.mrb[0].mxu0
      %v643 = vadd.f32 0.0, %v642
      %v644 = vpop.f32.mrb[0].mxu0
      %645 = vmatprep.mubr.bf16.mxu0 0
      %646 = vmatmul.mubr.bf16.gmra.mrb[0].mxu0 %v473
      %v647 = vpop.f32.mrb[0].mxu0
      %v648 = vadd.f32 0.0, %v647
      %v649 = vpop.f32.mrb[0].mxu0
      %v650 = vpop.f32.mrb[0].mxu0
      %v651 = vadd.f32 0.0, %v650
      %v652 = vpop.f32.mrb[0].mxu0
      %653 = vmatprep.mubr.bf16.mxu0 0
      %654 = vmatmul.mubr.bf16.gmra.mrb[0].mxu0 %v476
      %v655 = vpop.f32.mrb[0].mxu0
      %v656 = vadd.f32 0.0, %v655
      %v657 = vpop.f32.mrb[0].mxu0
      %v658 = vpop.f32.mrb[0].mxu0
      %v659 = vadd.f32 0.0, %v658
      %v660 = vpop.f32.mrb[0].mxu0
      %661 = vmatprep.mubr.bf16.mxu0 0
      %662 = vmatmul.mubr.bf16.gmra.mrb[0].mxu0 %v479
      %v663 = vpop.f32.mrb[0].mxu0
      %v664 = vadd.f32 0.0, %v663
      %v665 = vpop.f32.mrb[0].mxu0
      %v666 = vpop.f32.mrb[0].mxu0
      %v667 = vadd.f32 0.0, %v666
      %v668 = vpop.f32.mrb[0].mxu0
      %669 = vmatprep.mubr.bf16.mxu0 0
      %670 = vmatmul.mubr.bf16.gmra.mrb[0].mxu0 %v482
      %v671 = vpop.f32.mrb[0].mxu0
      %v672 = vadd.f32 0.0, %v671
      %v673 = vpop.f32.mrb[0].mxu0
      %v674 = vpop.f32.mrb[0].mxu0
      %v675 = vadd.f32 0.0, %v674
      %v676 = vpop.f32.mrb[0].mxu0
      %677 = vmatprep.mubr.bf16.mxu0 0
      %678 = vmatmul.mubr.bf16.gmra.mrb[0].mxu0 %v485
      %v679 = vpop.f32.mrb[0].mxu0
      %v680 = vadd.f32 0.0, %v679
      %v681 = vpop.f32.mrb[0].mxu0
      %v682 = vpop.f32.mrb[0].mxu0
      %v683 = vadd.f32 0.0, %v682
      %v684 = vpop.f32.mrb[0].mxu0
      %685 = vmatprep.mubr.bf16.mxu0 0
      %686 = vmatmul.mubr.bf16.gmra.mrb[0].mxu0 %v488
      %v687 = vpop.f32.mrb[0].mxu0
      %v688 = vadd.f32 0.0, %v687
      %v689 = vpop.f32.mrb[0].mxu0
      %v690 = vpop.f32.mrb[0].mxu0
      %v691 = vadd.f32 0.0, %v690
      %v692 = vpop.f32.mrb[0].mxu0
      %693 = vmatprep.mubr.bf16.mxu0 0
      %694 = vmatmul.mubr.bf16.gmra.mrb[0].mxu0 %v491
      %v695 = vpop.f32.mrb[0].mxu0
      %v696 = vadd.f32 0.0, %v695
      %v697 = vpop.f32.mrb[0].mxu0
      %v698 = vpop.f32.mrb[0].mxu0
      %v699 = vadd.f32 0.0, %v698
      %v700 = vpop.f32.mrb[0].mxu0
      %701 = vmatprep.mubr.bf16.mxu0 0
      %702 = vmatmul.mubr.bf16.gmra.mrb[0].mxu0 %v494
      %v703 = vpop.f32.mrb[0].mxu0
      %v704 = vadd.f32 0.0, %v703
      %v705 = vpop.f32.mrb[0].mxu0
      %v706 = vpop.f32.mrb[0].mxu0
      %v707 = vadd.f32 0.0, %v706
      %v708 = vpop.f32.mrb[0].mxu0
      %709 = vmatprep.mubr.bf16.mxu0 0
      %710 = vmatmul.mubr.bf16.gmra.mrb[0].mxu0 %v497
      %v711 = vpop.f32.mrb[0].mxu0
      %v712 = vadd.f32 0.0, %v711
      %v713 = vpop.f32.mrb[0].mxu0
      %v714 = vpop.f32.mrb[0].mxu0
      %v715 = vadd.f32 0.0, %v714
      %v716 = vpop.f32.mrb[0].mxu0
      %717 = vmatprep.mubr.bf16.mxu0 0
      %718 = vmatmul.mubr.bf16.gmra.mrb[0].mxu0 %v500
      %v719 = vpop.f32.mrb[0].mxu0
      %v720 = vadd.f32 0.0, %v719
      %v721 = vpop.f32.mrb[0].mxu0
      %v722 = vpop.f32.mrb[0].mxu0
      %v723 = vadd.f32 0.0, %v722
      %v724 = vpop.f32.mrb[0].mxu0
      %725 = vmatprep.mubr.bf16.mxu0 0
      %726 = vmatmul.mubr.bf16.gmra.mrb[0].mxu0 %v503
      %v727 = vpop.f32.mrb[0].mxu0
      %v728 = vadd.f32 0.0, %v727
      %v729 = vpop.f32.mrb[0].mxu0
      %v730 = vpop.f32.mrb[0].mxu0
      %v731 = vadd.f32 0.0, %v730
      %v732 = vpop.f32.mrb[0].mxu0
      %733 = vmatprep.mubr.bf16.mxu0 0
      %734 = vmatmul.mubr.bf16.gmra.mrb[0].mxu0 %v506
      %v735 = vpop.f32.mrb[0].mxu0
      %v736 = vadd.f32 0.0, %v735
      %v737 = vpop.f32.mrb[0].mxu0
      %v738 = vpop.f32.mrb[0].mxu0
      %v739 = vadd.f32 0.0, %v738
      %v740 = vpop.f32.mrb[0].mxu0
      %741 = vmatprep.mubr.bf16.mxu0 0
      %742 = vmatmul.mubr.bf16.gmra.mrb[0].mxu0 %v509
      %v743 = vpop.f32.mrb[0].mxu0
      %v744 = vadd.f32 0.0, %v743
      %v745 = vpop.f32.mrb[0].mxu0
      %v746 = vpop.f32.mrb[0].mxu0
      %v747 = vadd.f32 0.0, %v746
      %v748 = vpop.f32.mrb[0].mxu0
      %749 = vmatprep.mubr.bf16.mxu0 0
      %750 = vmatmul.mubr.bf16.gmra.mrb[0].mxu0 %v512
      %v751 = vpop.f32.mrb[0].mxu0
      %v752 = vadd.f32 0.0, %v751
      %v753 = vpop.f32.mrb[0].mxu0
      %v754 = vpop.f32.mrb[0].mxu0
      %v755 = vadd.f32 0.0, %v754
      %v756 = vpop.f32.mrb[0].mxu0
      %757 = vmatprep.mubr.bf16.mxu0 0
      %758 = vmatmul.mubr.bf16.gmra.mrb[0].mxu0 %v515
      %v759 = vpop.f32.mrb[0].mxu0
      %v760 = vadd.f32 0.0, %v759
      %v761 = vpop.f32.mrb[0].mxu0
      %v762 = vpop.f32.mrb[0].mxu0
      %v763 = vadd.f32 0.0, %v762
      %v764 = vpop.f32.mrb[0].mxu0
      %765 = vmatprep.mubr.bf16.mxu0 0
      %766 = vmatmul.mubr.bf16.gmra.mrb[0].mxu0 %v518
      %v767 = vpop.f32.mrb[0].mxu0
      %v768 = vadd.f32 0.0, %v767
      %v769 = vpop.f32.mrb[0].mxu0
      %v770 = vpop.f32.mrb[0].mxu0
      %v771 = vadd.f32 0.0, %v770
      %v772 = vpop.f32.mrb[0].mxu0
      %773 = vmatprep.mubr.bf16.mxu0 0
      %774 = vmatmul.mubr.bf16.gmra.mrb[0].mxu0 %v521
      %v775 = vpop.f32.mrb[0].mxu0
      %v776 = vadd.f32 0.0, %v775
      %v777 = vpop.f32.mrb[0].mxu0
      %v778 = vpop.f32.mrb[0].mxu0
      %v779 = vadd.f32 0.0, %v778
      %v780 = vpop.f32.mrb[0].mxu0
      %781 = vmatprep.mubr.bf16.mxu0 0
      %782 = vmatmul.mubr.bf16.gmra.mrb[0].mxu0 %v524
      %v783 = vpop.f32.mrb[0].mxu0
      %v784 = vadd.f32 0.0, %v783
      %v785 = vpop.f32.mrb[0].mxu0
      %v786 = vpop.f32.mrb[0].mxu0
      %v787 = vadd.f32 0.0, %v786
      %v788 = vpop.f32.mrb[0].mxu0
      %789 = vmatprep.mubr.bf16.mxu0 0
      %790 = vmatmul.mubr.bf16.gmra.mrb[0].mxu0 %v527
      %v791 = vpop.f32.mrb[0].mxu0
      %v792 = vadd.f32 0.0, %v791
      %v793 = vpop.f32.mrb[0].mxu0
      %v794 = vpop.f32.mrb[0].mxu0
      %v795 = vadd.f32 0.0, %v794
      %v796 = vpop.f32.mrb[0].mxu0
      %797 = vmatprep.mubr.bf16.mxu0 0
      %798 = vmatmul.mubr.bf16.gmra.mrb[0].mxu0 %v530
      %v799 = vpop.f32.mrb[0].mxu0
      %v800 = vadd.f32 0.0, %v799
      %v801 = vpop.f32.mrb[0].mxu0
      %v802 = vpop.f32.mrb[0].mxu0
      %v803 = vadd.f32 0.0, %v802
      %v804 = vpop.f32.mrb[0].mxu0
      %805 = vmatprep.mubr.bf16.mxu0 0
      %806 = vmatmul.mubr.bf16.gmra.mrb[0].mxu0 %v533
      %v807 = vpop.f32.mrb[0].mxu0
      %v808 = vadd.f32 0.0, %v807
      %v809 = vpop.f32.mrb[0].mxu0
      %v810 = vpop.f32.mrb[0].mxu0
      %v811 = vadd.f32 0.0, %v810
      %v812 = vpop.f32.mrb[0].mxu0
      %813 = vmatprep.mubr.bf16.mxu0 0
      %814 = vmatmul.mubr.bf16.gmra.mrb[0].mxu0 %v536
      %v815 = vpop.f32.mrb[0].mxu0
      %v816 = vadd.f32 0.0, %v815
      %v817 = vpop.f32.mrb[0].mxu0
      %v818 = vpop.f32.mrb[0].mxu0
      %v819 = vadd.f32 0.0, %v818
      %v820 = vpop.f32.mrb[0].mxu0
      %821 = vmatprep.mubr.bf16.mxu0 0
      %822 = vmatmul.mubr.bf16.gmra.mrb[0].mxu0 %v539
      %v823 = vpop.f32.mrb[0].mxu0
      %v824 = vadd.f32 0.0, %v823
      %v825 = vpop.f32.mrb[0].mxu0
      %v826 = vpop.f32.mrb[0].mxu0
      %v827 = vadd.f32 0.0, %v826
      %v828 = vpop.f32.mrb[0].mxu0
      %829 = vdwg.mxu0
      %v830 = vtanh.pop %v576
      %v831 = vtanh.pop %v579
      %v832 = vtanh.pop %v584
      %v833 = vtanh.pop %v587
      %v834 = vtanh.pop %v592
      %v835 = vtanh.pop %v595
      %v836 = vtanh.pop %v600
      %v837 = vtanh.pop %v603
      %v838 = vtanh.pop %v608
      %v839 = vtanh.pop %v611
      %v840 = vtanh.pop %v616
      %v841 = vtanh.pop %v619
      %v842 = vtanh.pop %v624
      %v843 = vtanh.pop %v627
      %v844 = vtanh.pop %v632
      %v845 = vtanh.pop %v635
      %v846 = vtanh.pop %v640
      %v847 = vtanh.pop %v643
      %v848 = vtanh.pop %v648
      %v849 = vtanh.pop %v651
      %v850 = vtanh.pop %v656
      %v851 = vtanh.pop %v659
      %v852 = vtanh.pop %v664
      %v853 = vtanh.pop %v667
      %v854 = vtanh.pop %v672
      %v855 = vtanh.pop %v675
      %v856 = vtanh.pop %v680
      %v857 = vtanh.pop %v683
      %v858 = vtanh.pop %v688
      %v859 = vtanh.pop %v691
      %v860 = vtanh.pop %v696
      %v861 = vtanh.pop %v699
      %v862 = vtanh.pop %v704
      %v863 = vtanh.pop %v707
      %v864 = vtanh.pop %v712
      %v865 = vtanh.pop %v715
      %v866 = vtanh.pop %v720
      %v867 = vtanh.pop %v723
      %v868 = vtanh.pop %v728
      %v869 = vtanh.pop %v731
      %v870 = vtanh.pop %v736
      %v871 = vtanh.pop %v739
      %v872 = vtanh.pop %v744
      %v873 = vtanh.pop %v747
      %v874 = vtanh.pop %v752
      %v875 = vtanh.pop %v755
      %v876 = vtanh.pop %v760
      %v877 = vtanh.pop %v763
      %v878 = vtanh.pop %v768
      %v879 = vtanh.pop %v771
      %v880 = vtanh.pop %v776
      %v881 = vtanh.pop %v779
      %v882 = vtanh.pop %v784
      %v883 = vtanh.pop %v787
      %v884 = vtanh.pop %v792
      %v885 = vtanh.pop %v795
      %v886 = vtanh.pop %v800
      %v887 = vtanh.pop %v803
      %v888 = vtanh.pop %v808
      %v889 = vtanh.pop %v811
      %v890 = vtanh.pop %v816
      %v891 = vtanh.pop %v819
      %v892 = vtanh.pop %v824
      %v893 = vtanh.pop %v827
      %vm894 = vcmask 23552
      %895 = vst.msk [vmem:[%s201] sm:$0xff] %vm894, %v830
      %896 = vst.msk [vmem:[%s201 + $0x8] sm:$0xff] %vm894, %v831
      %897 = vst.msk [vmem:[%s201 + $0x10] sm:$0xff] %vm894, %v832
      %898 = vst.msk [vmem:[%s201 + $0x18] sm:$0xff] %vm894, %v833
      %899 = vst.msk [vmem:[%s201 + $0x20] sm:$0xff] %vm894, %v834
      %900 = vst.msk [vmem:[%s201 + $0x28] sm:$0xff] %vm894, %v835
      %901 = vst.msk [vmem:[%s201 + $0x30] sm:$0xff] %vm894, %v836
      %902 = vst.msk [vmem:[%s201 + $0x38] sm:$0xff] %vm894, %v837
      %903 = vst.msk [vmem:[%s201 + $0x40] sm:$0xff] %vm894, %v838
      %904 = vst.msk [vmem:[%s201 + $0x48] sm:$0xff] %vm894, %v839
      %905 = vst.msk [vmem:[%s201 + $0x50] sm:$0xff] %vm894, %v840
      %906 = vst.msk [vmem:[%s201 + $0x58] sm:$0xff] %vm894, %v841
      %907 = vst.msk [vmem:[%s201 + $0x60] sm:$0xff] %vm894, %v842
      %908 = vst.msk [vmem:[%s201 + $0x68] sm:$0xff] %vm894, %v843
      %909 = vst.msk [vmem:[%s201 + $0x70] sm:$0xff] %vm894, %v844
      %910 = vst.msk [vmem:[%s201 + $0x78] sm:$0xff] %vm894, %v845
      %911 = vst.msk [vmem:[%s201 + $0x80] sm:$0xff] %vm894, %v846
      %912 = vst.msk [vmem:[%s201 + $0x88] sm:$0xff] %vm894, %v847
      %913 = vst.msk [vmem:[%s201 + $0x90] sm:$0xff] %vm894, %v848
      %914 = vst.msk [vmem:[%s201 + $0x98] sm:$0xff] %vm894, %v849
      %915 = vst.msk [vmem:[%s201 + $0xa0] sm:$0xff] %vm894, %v850
      %916 = vst.msk [vmem:[%s201 + $0xa8] sm:$0xff] %vm894, %v851
      %917 = vst.msk [vmem:[%s201 + $0xb0] sm:$0xff] %vm894, %v852
      %918 = vst.msk [vmem:[%s201 + $0xb8] sm:$0xff] %vm894, %v853
      %919 = vst.msk [vmem:[%s201 + $0xc0] sm:$0xff] %vm894, %v854
      %920 = vst.msk [vmem:[%s201 + $0xc8] sm:$0xff] %vm894, %v855
      %921 = vst.msk [vmem:[%s201 + $0xd0] sm:$0xff] %vm894, %v856
      %922 = vst.msk [vmem:[%s201 + $0xd8] sm:$0xff] %vm894, %v857
      %923 = vst.msk [vmem:[%s201 + $0xe0] sm:$0xff] %vm894, %v858
      %924 = vst.msk [vmem:[%s201 + $0xe8] sm:$0xff] %vm894, %v859
      %925 = vst.msk [vmem:[%s201 + $0xf0] sm:$0xff] %vm894, %v860
      %926 = vst.msk [vmem:[%s201 + $0xf8] sm:$0xff] %vm894, %v861
      %927 = vst.msk [vmem:[%s201 + $0x100] sm:$0xff] %vm894, %v862
      %928 = vst.msk [vmem:[%s201 + $0x108] sm:$0xff] %vm894, %v863
      %929 = vst.msk [vmem:[%s201 + $0x110] sm:$0xff] %vm894, %v864
      %930 = vst.msk [vmem:[%s201 + $0x118] sm:$0xff] %vm894, %v865
      %931 = vst.msk [vmem:[%s201 + $0x120] sm:$0xff] %vm894, %v866
      %932 = vst.msk [vmem:[%s201 + $0x128] sm:$0xff] %vm894, %v867
      %933 = vst.msk [vmem:[%s201 + $0x130] sm:$0xff] %vm894, %v868
      %934 = vst.msk [vmem:[%s201 + $0x138] sm:$0xff] %vm894, %v869
      %935 = vst.msk [vmem:[%s201 + $0x140] sm:$0xff] %vm894, %v870
      %936 = vst.msk [vmem:[%s201 + $0x148] sm:$0xff] %vm894, %v871
      %937 = vst.msk [vmem:[%s201 + $0x150] sm:$0xff] %vm894, %v872
      %938 = vst.msk [vmem:[%s201 + $0x158] sm:$0xff] %vm894, %v873
      %939 = vst.msk [vmem:[%s201 + $0x160] sm:$0xff] %vm894, %v874
      %940 = vst.msk [vmem:[%s201 + $0x168] sm:$0xff] %vm894, %v875
      %941 = vst.msk [vmem:[%s201 + $0x170] sm:$0xff] %vm894, %v876
      %942 = vst.msk [vmem:[%s201 + $0x178] sm:$0xff] %vm894, %v877
      %943 = vst.msk [vmem:[%s201 + $0x180] sm:$0xff] %vm894, %v878
      %944 = vst.msk [vmem:[%s201 + $0x188] sm:$0xff] %vm894, %v879
      %945 = vst.msk [vmem:[%s201 + $0x190] sm:$0xff] %vm894, %v880
      %946 = vst.msk [vmem:[%s201 + $0x198] sm:$0xff] %vm894, %v881
      %947 = vst.msk [vmem:[%s201 + $0x1a0] sm:$0xff] %vm894, %v882
      %948 = vst.msk [vmem:[%s201 + $0x1a8] sm:$0xff] %vm894, %v883
      %949 = vst.msk [vmem:[%s201 + $0x1b0] sm:$0xff] %vm894, %v884
      %950 = vst.msk [vmem:[%s201 + $0x1b8] sm:$0xff] %vm894, %v885
      %951 = vst.msk [vmem:[%s201 + $0x1c0] sm:$0xff] %vm894, %v886
      %952 = vst.msk [vmem:[%s201 + $0x1c8] sm:$0xff] %vm894, %v887
      %953 = vst.msk [vmem:[%s201 + $0x1d0] sm:$0xff] %vm894, %v888
      %954 = vst.msk [vmem:[%s201 + $0x1d8] sm:$0xff] %vm894, %v889
      %955 = vst.msk [vmem:[%s201 + $0x1e0] sm:$0xff] %vm894, %v890
      %956 = vst.msk [vmem:[%s201 + $0x1e8] sm:$0xff] %vm894, %v891
      %957 = vst.msk [vmem:[%s201 + $0x1f0] sm:$0xff] %vm894, %v892
      %958 = vst.msk [vmem:[%s201 + $0x1f8] sm:$0xff] %vm894, %v893
      %s959 = smul.u32 64, %s18
      %p960 = scmp.lt.s32.totalorder %s17, 3
      %s961 = scalar_select %p960, %s17, 3
      %p962 = scmp.lt.s32.totalorder %s959, 63
      %s963 = scalar_select %p962, %s959, 63
      %s964 = smul.addr %s961, 64
      %s965 = sadd.s32 %s963, %s964
      %s966 = smul.addr %s965, 8
      %s967 = scalar_lea.vmem %s2, %s966
      // Predicated region
      $region29: #{_lambda_.7} parent=27 // pred_check
        %p968 = pneg %p99
      $region30: #{_lambda_.7} parent=27 // pred_check_branch
        %970 = sbr.rel (%p968) target = $region32
      $region31: #{_lambda_.7} parent=27 // pred_region
        %s971 = smul.u32 64, %s18
      $region32: #{_lambda_.7} parent=27 // pred_fallthru
        _
    $region28: #{_lambda_.7} parent=5 // pred_fallthru
      _
    %p972 = scmp.le.s32.totalorder 2, %s8
    // Predicated region
    $region33: #{_lambda_.7} parent=5 // pred_check
      %p973 = pneg %p972
    $region34: #{_lambda_.7} parent=5 // pred_check_branch
      %975 = sbr.rel (%p973) target = $region36
    $region35: #{_lambda_.7} parent=5 // pred_region
      %s976 = ssub.s32 %s8, 2
      // Predicated region
      $region37: #{_lambda_.7} parent=35 // pred_check
        %p977 = pneg %p105
      $region38: #{_lambda_.7} parent=35 // pred_check_branch
        %979 = sbr.rel (%p977) target = $region40
      $region39: #{_lambda_.7} parent=35 // pred_region
        %s980 = smul.u32 64, %s20
        %p981 = scmp.lt.s32.totalorder %s19, 3
        %s982 = scalar_select %p981, %s19, 3
        %p983 = scmp.lt.s32.totalorder %s980, 63
        %s984 = scalar_select %p983, %s980, 63
        %s985 = smul.addr %s982, 64
        %s986 = sadd.s32 %s984, %s985
        %s987 = smul.addr %s986, 8
        %s988 = scalar_lea.vmem %s2, %s987
      $region40: #{_lambda_.7} parent=35 // pred_fallthru
        _
    $region36: #{_lambda_.7} parent=5 // pred_fallthru
      _
  $region6: #{_lambda_.7} parent=0 // loop_footer
    %s12 = sadd.s32 1, %s8
  $region7: #{_lambda_.7} parent=0 // loop_footer_branch
    %7 = sbr.rel target = $region3
  $region8: #{_lambda_.7} parent=0 // loop_exit
    _

</llo_original>
